<compile_context>
chip_gen: v7x
topology: tpu7x:2x2x1
jax: 0.10.0
libtpu: 0.0.40
codegen_flags: <defaults>
</compile_context>

<pallas_src>
import jax
import jax.numpy as jnp
from jax.experimental import pallas as pl
from jax.experimental.pallas import tpu as pltpu


NEG_SLOPE = 0.01
LANE = 128


def _round_up(n, m):
    return ((n + m - 1) // m) * m


def _leaky_relu(x):
    return jnp.where(x > 0, x, NEG_SLOPE * x)


def mlp_kernel(x_ref, w1_ref, b1_ref, w2_ref, b2_ref, o_ref):
    # x_ref: [TB, In] bf16; w1_ref: [In, Hp] bf16; b1_ref: [1, Hp] f32
    # w2_ref: [Hp, Op] bf16; b2_ref: [1, Op] f32; o_ref: [TB, Op] f32
    x = x_ref[...]
    # fnn1: x @ W1 + b1 (bf16 operands, f32 accumulation on the MXU)
    h = jnp.dot(x, w1_ref[...], preferred_element_type=jnp.float32)
    h = h + b1_ref[...]
    h = _leaky_relu(h)                                   # hidden_state (f32)
    # fnn2: h @ W2 + b2
    o = jnp.dot(h.astype(jnp.bfloat16), w2_ref[...],
                preferred_element_type=jnp.float32)
    o = o + b2_ref[...]
    o = _leaky_relu(o)                                   # activation on output layer
    o_ref[...] = o.astype(o_ref.dtype)


def neural_net_forward(x, w1, b1, w2, b2, *, block_b=512):
    """x: [B, input_size]; w1: [input_size, hidden]; b1: [1, hidden];
       w2: [hidden, output]; b2: [1, output] -> [B, output] (float32)."""
    B, In = x.shape
    H = w1.shape[1]
    Out = w2.shape[1]

    # Pad hidden/output feature dims to lane width (128) so stores are lane-dense.
    Hp = _round_up(H, LANE)
    Op = _round_up(Out, LANE)
    w1p = jnp.pad(w1, ((0, 0), (0, Hp - H))).astype(jnp.bfloat16)
    b1p = jnp.pad(b1, ((0, 0), (0, Hp - H))).astype(jnp.float32)
    w2p = jnp.pad(w2, ((0, Hp - H), (0, Op - Out))).astype(jnp.bfloat16)
    b2p = jnp.pad(b2, ((0, 0), (0, Op - Out))).astype(jnp.float32)

    # Batch tiling: TB rows per grid step; pad B up to a multiple of TB.
    TB = min(block_b, _round_up(B, 8))
    Bp = _round_up(B, TB)
    xb = x.astype(jnp.bfloat16)
    if Bp > B:
        xb = jnp.pad(xb, ((0, Bp - B), (0, 0)))

    grid = (Bp // TB,)
    out = pl.pallas_call(
        mlp_kernel,
        out_shape=jax.ShapeDtypeStruct((Bp, Op), jnp.float32),
        grid_spec=pltpu.PrefetchScalarGridSpec(
            num_scalar_prefetch=0,
            grid=grid,
            in_specs=[
                pl.BlockSpec((TB, In), lambda i: (i, 0)),   # x: tiled over batch
                pl.BlockSpec((In, Hp), lambda i: (0, 0)),   # W1: resident
                pl.BlockSpec((1, Hp), lambda i: (0, 0)),    # b1: resident
                pl.BlockSpec((Hp, Op), lambda i: (0, 0)),   # W2: resident
                pl.BlockSpec((1, Op), lambda i: (0, 0)),    # b2: resident
            ],
            out_specs=pl.BlockSpec((TB, Op), lambda i: (i, 0)),
        ),
        compiler_params=pltpu.CompilerParams(
            dimension_semantics=("parallel",)),
    )(xb, w1p, b1p, w2p, b2p)

    return out[:B, :Out]


def init_params(key, input_size, hidden_size, output_size, dtype=jnp.float32):
    """Deterministic init mimicking nn.Linear's uniform(-1/sqrt(fan_in), 1/sqrt(fan_in))."""
    k1, k2, k3, k4 = jax.random.split(key, 4)
    bound1 = 1.0 / jnp.sqrt(input_size)
    bound2 = 1.0 / jnp.sqrt(hidden_size)
    w1 = jax.random.uniform(k1, (input_size, hidden_size), dtype, -bound1, bound1)
    b1 = jax.random.uniform(k2, (1, hidden_size), dtype, -bound1, bound1)
    w2 = jax.random.uniform(k3, (hidden_size, output_size), dtype, -bound2, bound2)
    b2 = jax.random.uniform(k4, (1, output_size), dtype, -bound2, bound2)
    return w1, b1, w2, b2


if __name__ == "__main__":
    # Feature dims implied by the module stay small (input=16, hidden=32, output=8);
    # batch is grown to 1024 so the batch-tiled grid (TB=512 -> 2 steps) is exercised.
    B, input_size, hidden_size, output_size = 1024, 16, 32, 8

    key = jax.random.PRNGKey(0)
    kx, kp = jax.random.split(key)
    x = jax.random.normal(kx, (B, input_size), jnp.float32)
    w1, b1, w2, b2 = init_params(kp, input_size, hidden_size, output_size)

    out = neural_net_forward(x, w1, b1, w2, b2)
    out = jax.block_until_ready(out)

    # Pure-JAX reference with the same bf16-operand / f32-accumulate numerics.
    def ref(x):
        xb = x.astype(jnp.bfloat16)
        w1b = w1.astype(jnp.bfloat16)
        w2b = w2.astype(jnp.bfloat16)
        h = jnp.dot(xb, w1b, preferred_element_type=jnp.float32) + b1
        h = jnp.where(h > 0, h, NEG_SLOPE * h)
        o = jnp.dot(h.astype(jnp.bfloat16), w2b,
                    preferred_element_type=jnp.float32) + b2
        return jnp.where(o > 0, o, NEG_SLOPE * o)

    expected = ref(x)
    assert out.shape == (B, output_size)
    assert jnp.allclose(out, expected, atol=1e-3, rtol=1e-3), (
        float(jnp.max(jnp.abs(out - expected))))

    print("KERNEL_OK")
</pallas_src>

<mosaic_0001>
module attributes {stable_mosaic.version = 11 : i64} {
  func.func @mlp_kernel(%arg0: i32, %arg1: memref<512x16xbf16, #tpu.memory_space<vmem>>, %arg2: memref<16x128xbf16, #tpu.memory_space<vmem>>, %arg3: memref<1x128xf32, #tpu.memory_space<vmem>>, %arg4: memref<128x128xbf16, #tpu.memory_space<vmem>>, %arg5: memref<1x128xf32, #tpu.memory_space<vmem>>, %arg6: memref<512x128xf32, #tpu.memory_space<vmem>>) attributes {dimension_semantics = [#tpu.dimension_semantics<parallel>], iteration_bounds = array<i64: 2>, scalar_prefetch = 0 : i64, scratch_operands = 0 : i64, tpu.core_type = #tpu.core_type<tc>, window_params = [{transform_indices = @transform_0, window_bounds = array<i64: 512, 16>}, {pipeline_mode = #tpu.pipeline_mode<synchronous>, transform_indices = @transform_1, window_bounds = array<i64: 16, 128>}, {pipeline_mode = #tpu.pipeline_mode<synchronous>, transform_indices = @transform_2, window_bounds = array<i64: 1, 128>}, {pipeline_mode = #tpu.pipeline_mode<synchronous>, transform_indices = @transform_3, window_bounds = array<i64: 128, 128>}, {pipeline_mode = #tpu.pipeline_mode<synchronous>, transform_indices = @transform_4, window_bounds = array<i64: 1, 128>}, {transform_indices = @transform_5, window_bounds = array<i64: 512, 128>}]} {
    %c0 = arith.constant 0 : index
    %c0_0 = arith.constant 0 : index
    %0 = vector.load %arg1[%c0, %c0_0] : memref<512x16xbf16, #tpu.memory_space<vmem>>, vector<512x16xbf16>
    %c0_1 = arith.constant 0 : index
    %c0_2 = arith.constant 0 : index
    %1 = vector.load %arg2[%c0_1, %c0_2] : memref<16x128xbf16, #tpu.memory_space<vmem>>, vector<16x128xbf16>
    %cst = arith.constant dense<0.000000e+00> : vector<512x128xf32>
    %2 = tpu.matmul %0, %1, %cst {dimension_numbers = #tpu.dot_dimension_numbers<[1], [0], [0], [1], [0, 0, 1, 1], [], []>} : vector<512x16xbf16>, vector<16x128xbf16>, vector<512x128xf32> -> vector<512x128xf32>
    %c0_3 = arith.constant 0 : index
    %c0_4 = arith.constant 0 : index
    %3 = vector.load %arg3[%c0_3, %c0_4] : memref<1x128xf32, #tpu.memory_space<vmem>>, vector<1x128xf32>
    %4 = vector.broadcast %3 : vector<1x128xf32> to vector<512x128xf32>
    %5 = arith.addf %2, %4 : vector<512x128xf32>
    %cst_5 = arith.constant 0.000000e+00 : f32
    %6 = vector.broadcast %cst_5 : f32 to vector<512x128xf32>
    %7 = arith.cmpf ogt, %5, %6 : vector<512x128xf32>
    %cst_6 = arith.constant 0.00999999977 : f32
    %8 = vector.broadcast %cst_6 : f32 to vector<512x128xf32>
    %9 = arith.mulf %8, %5 : vector<512x128xf32>
    %10 = arith.select %7, %5, %9 : vector<512x128xi1>, vector<512x128xf32>
    %11 = arith.truncf %10 : vector<512x128xf32> to vector<512x128xbf16>
    %c0_7 = arith.constant 0 : index
    %c0_8 = arith.constant 0 : index
    %12 = vector.load %arg4[%c0_7, %c0_8] : memref<128x128xbf16, #tpu.memory_space<vmem>>, vector<128x128xbf16>
    %cst_9 = arith.constant dense<0.000000e+00> : vector<512x128xf32>
    %13 = tpu.matmul %11, %12, %cst_9 {dimension_numbers = #tpu.dot_dimension_numbers<[1], [0], [0], [1], [0, 0, 1, 1], [], []>} : vector<512x128xbf16>, vector<128x128xbf16>, vector<512x128xf32> -> vector<512x128xf32>
    %c0_10 = arith.constant 0 : index
    %c0_11 = arith.constant 0 : index
    %14 = vector.load %arg5[%c0_10, %c0_11] : memref<1x128xf32, #tpu.memory_space<vmem>>, vector<1x128xf32>
    %15 = vector.broadcast %14 : vector<1x128xf32> to vector<512x128xf32>
    %16 = arith.addf %13, %15 : vector<512x128xf32>
    %cst_12 = arith.constant 0.000000e+00 : f32
    %17 = vector.broadcast %cst_12 : f32 to vector<512x128xf32>
    %18 = arith.cmpf ogt, %16, %17 : vector<512x128xf32>
    %cst_13 = arith.constant 0.00999999977 : f32
    %19 = vector.broadcast %cst_13 : f32 to vector<512x128xf32>
    %20 = arith.mulf %19, %16 : vector<512x128xf32>
    %21 = arith.select %18, %16, %20 : vector<512x128xi1>, vector<512x128xf32>
    %c0_14 = arith.constant 0 : index
    %c0_15 = arith.constant 0 : index
    %22 = vector.load %arg6[%c0_14, %c0_15] : memref<512x128xf32, #tpu.memory_space<vmem>>, vector<512x128xf32>
    tpu.vector_store %arg6[%c0_14, %c0_15], %21 {strides = array<i32>} : memref<512x128xf32, #tpu.memory_space<vmem>>, vector<512x128xf32>,
    return
  }
  func.func @transform_0(%arg0: i32) -> (i32, i32) {
    %c0_i32 = arith.constant 0 : i32
    %c0_i32_0 = arith.constant 0 : i32
    return %arg0, %c0_i32 : i32, i32
  }
  func.func @transform_1(%arg0: i32) -> (i32, i32) {
    %c0_i32 = arith.constant 0 : i32
    %c0_i32_0 = arith.constant 0 : i32
    %c0_i32_1 = arith.constant 0 : i32
    return %c0_i32, %c0_i32_0 : i32, i32
  }
  func.func @transform_2(%arg0: i32) -> (i32, i32) {
    %c0_i32 = arith.constant 0 : i32
    %c0_i32_0 = arith.constant 0 : i32
    %c0_i32_1 = arith.constant 0 : i32
    return %c0_i32, %c0_i32_0 : i32, i32
  }
  func.func @transform_3(%arg0: i32) -> (i32, i32) {
    %c0_i32 = arith.constant 0 : i32
    %c0_i32_0 = arith.constant 0 : i32
    %c0_i32_1 = arith.constant 0 : i32
    return %c0_i32, %c0_i32_0 : i32, i32
  }
  func.func @transform_4(%arg0: i32) -> (i32, i32) {
    %c0_i32 = arith.constant 0 : i32
    %c0_i32_0 = arith.constant 0 : i32
    %c0_i32_1 = arith.constant 0 : i32
    return %c0_i32, %c0_i32_0 : i32, i32
  }
  func.func @transform_5(%arg0: i32) -> (i32, i32) {
    %c0_i32 = arith.constant 0 : i32
    %c0_i32_0 = arith.constant 0 : i32
    return %arg0, %c0_i32 : i32, i32
  }
}

</mosaic_0001>

<llo_original>
// kernel: tpu_custom_call.1
$region0: #{tpu_custom_call.1}
  #allocation0 [shape = 'u32[]', space=smem, size = 0x4, offset = 0x4, fixed_abs, tag = 'smem constant byte address 0x4 - core index']
  #allocation1 [shape = 'u32[144,128]{1,0:T(1,128)}', space=vmem, size = 0x12000, scoped, tag = 'internal scratch']
  %s0 = inlined_call_operand.vmem [shape: bf16[1024,16], index: 0, kind: input, shape index: {}]
  %s1 = inlined_call_operand.vmem [shape: bf16[16,128], index: 1, kind: input, shape index: {}]
  %s2 = inlined_call_operand.vmem [shape: f32[1,128], index: 2, kind: input, shape index: {}]
  %s3 = inlined_call_operand.vmem [shape: bf16[128,128], index: 3, kind: input, shape index: {}]
  %s4 = inlined_call_operand.vmem [shape: f32[1,128], index: 4, kind: input, shape index: {}]
  %s5 = inlined_call_operand.hbm [shape: f32[1024,128], index: 5, kind: output, shape index: {}]
  %s6 = sld [smem:[#allocation0]]
  $region53: #{tpu_custom_call.1} parent=0
    _
  %s8 = ssub.s32 1, %s6
  %s9 = scalar_select 0, %s8, %s6
  $region1: #{tpu_custom_call.1} parent=0
    #allocation2 [shape = 'u8[524288]{0}', space=vmem, size = 0x80000, scoped, tag = 'output window, operand 0']
    #allocation3 [shape = 's32[2]{0}', space=sflag, size = 0x8, scoped, tag = 'scoped memory for tpu_custom_call.1']
    %10 = vsyncpa [#allocation3], 0
    %s11 = scalar_lea.sflag [#allocation3], 1
    %12 = vsyncpa %s11, 0
    loop: start=0, step=1, limit=4
    $region2: #{tpu_custom_call.1} parent=1 // loop_pre_header
      _
    $region3: #{tpu_custom_call.1} parent=1 // loop_header
      %s14 = sphi 0, %s18
      %p15 = scmp.ge.s32.totalorder %s14, 4
      %s24 = sphi 0, %s26
      %s27 = sphi 0, %s24
      %s28 = sphi 0, %s27
      %s44 = sphi 0, %s28
      %s48 = sphi 0, %s48
      %s50 = sphi 0, %s48
      %s51 = sphi 0, %s50
      %s65 = sphi 0, %s51
      %s69 = sphi 0, %s69
      %s71 = sphi 0, %s69
      %s72 = sphi 0, %s71
      %s86 = sphi 0, %s72
      %s90 = sphi 0, %s90
      %s92 = sphi 0, %s90
      %s93 = sphi 0, %s92
      %s107 = sphi 0, %s93
      %s111 = sphi 0, %s111
      %s113 = sphi 0, %s111
      %s114 = sphi 0, %s113
      %s128 = sphi 0, %s114
      %s134 = sphi 0, %s136
      %s137 = sphi 0, %s134
      %s138 = sphi 0, %s137
      %s154 = sphi 0, %s138
    $region4: #{tpu_custom_call.1} parent=1 // loop_header_branch
      %17 = sbr.rel (%p15) target = $region8
    $region5: #{tpu_custom_call.1} parent=1 // loop_body
      %s19 = ssub.s32 %s14, 1
      %s20 = ssub.s32 %s14, 2
      %s21 = sadd.s32 %s14, 1
      %s22 = ssub.s32 %s14, %s21
      %p23 = scmp.eq.s32.totalorder %s22, 0
      %s25 = sadd.s32 %s24, 1
      %s26 = scalar_select %p23, %s24, %s25
      %p29 = pneg %p23
      %p30 = scmp.eq.s32.totalorder %s14, 1
      %p31 = por %p29, %p30
      %p32 = scmp.ne.s32.totalorder %s24, %s27
      %p33 = scmp.eq.s32.totalorder %s14, 0
      %p34 = por %p32, %p33
      %p35 = scmp.ne.s32.totalorder %s24, %s27
      %p36 = scmp.eq.s32.totalorder %s19, 1
      %p37 = por %p35, %p36
      %p38 = scmp.ne.s32.totalorder %s27, %s28
      %p39 = scmp.eq.s32.totalorder %s19, 0
      %p40 = por %p38, %p39
      %p41 = scmp.ne.s32.totalorder %s27, %s28
      %p42 = scmp.eq.s32.totalorder %s20, 1
      %p43 = por %p41, %p42
      %p45 = scmp.ne.s32.totalorder %s28, %s44
      %p46 = scmp.eq.s32.totalorder %s20, 0
      %p47 = por %p45, %p46
      %s49 = sadd.s32 %s48, 1
      %p52 = scmp.eq.s32.totalorder %s14, 1
      %p53 = scmp.ne.s32.totalorder %s48, %s50
      %p54 = scmp.eq.s32.totalorder %s14, 0
      %p55 = por %p53, %p54
      %p56 = scmp.ne.s32.totalorder %s48, %s50
      %p57 = scmp.eq.s32.totalorder %s19, 1
      %p58 = por %p56, %p57
      %p59 = scmp.ne.s32.totalorder %s50, %s51
      %p60 = scmp.eq.s32.totalorder %s19, 0
      %p61 = por %p59, %p60
      %p62 = scmp.ne.s32.totalorder %s50, %s51
      %p63 = scmp.eq.s32.totalorder %s20, 1
      %p64 = por %p62, %p63
      %p66 = scmp.ne.s32.totalorder %s51, %s65
      %p67 = scmp.eq.s32.totalorder %s20, 0
      %p68 = por %p66, %p67
      %s70 = sadd.s32 %s69, 1
      %p73 = scmp.eq.s32.totalorder %s14, 1
      %p74 = scmp.ne.s32.totalorder %s69, %s71
      %p75 = scmp.eq.s32.totalorder %s14, 0
      %p76 = por %p74, %p75
      %p77 = scmp.ne.s32.totalorder %s69, %s71
      %p78 = scmp.eq.s32.totalorder %s19, 1
      %p79 = por %p77, %p78
      %p80 = scmp.ne.s32.totalorder %s71, %s72
      %p81 = scmp.eq.s32.totalorder %s19, 0
      %p82 = por %p80, %p81
      %p83 = scmp.ne.s32.totalorder %s71, %s72
      %p84 = scmp.eq.s32.totalorder %s20, 1
      %p85 = por %p83, %p84
      %p87 = scmp.ne.s32.totalorder %s72, %s86
      %p88 = scmp.eq.s32.totalorder %s20, 0
      %p89 = por %p87, %p88
      %s91 = sadd.s32 %s90, 1
      %p94 = scmp.eq.s32.totalorder %s14, 1
      %p95 = scmp.ne.s32.totalorder %s90, %s92
      %p96 = scmp.eq.s32.totalorder %s14, 0
      %p97 = por %p95, %p96
      %p98 = scmp.ne.s32.totalorder %s90, %s92
      %p99 = scmp.eq.s32.totalorder %s19, 1
      %p100 = por %p98, %p99
      %p101 = scmp.ne.s32.totalorder %s92, %s93
      %p102 = scmp.eq.s32.totalorder %s19, 0
      %p103 = por %p101, %p102
      %p104 = scmp.ne.s32.totalorder %s92, %s93
      %p105 = scmp.eq.s32.totalorder %s20, 1
      %p106 = por %p104, %p105
      %p108 = scmp.ne.s32.totalorder %s93, %s107
      %p109 = scmp.eq.s32.totalorder %s20, 0
      %p110 = por %p108, %p109
      %s112 = sadd.s32 %s111, 1
      %p115 = scmp.eq.s32.totalorder %s14, 1
      %p116 = scmp.ne.s32.totalorder %s111, %s113
      %p117 = scmp.eq.s32.totalorder %s14, 0
      %p118 = por %p116, %p117
      %p119 = scmp.ne.s32.totalorder %s111, %s113
      %p120 = scmp.eq.s32.totalorder %s19, 1
      %p121 = por %p119, %p120
      %p122 = scmp.ne.s32.totalorder %s113, %s114
      %p123 = scmp.eq.s32.totalorder %s19, 0
      %p124 = por %p122, %p123
      %p125 = scmp.ne.s32.totalorder %s113, %s114
      %p126 = scmp.eq.s32.totalorder %s20, 1
      %p127 = por %p125, %p126
      %p129 = scmp.ne.s32.totalorder %s114, %s128
      %p130 = scmp.eq.s32.totalorder %s20, 0
      %p131 = por %p129, %p130
      %s132 = ssub.s32 %s14, %s21
      %p133 = scmp.eq.s32.totalorder %s132, 0
      %s135 = sadd.s32 %s134, 1
      %s136 = scalar_select %p133, %s134, %s135
      %p139 = pneg %p133
      %p140 = scmp.eq.s32.totalorder %s14, 1
      %p141 = por %p139, %p140
      %p142 = scmp.ne.s32.totalorder %s134, %s137
      %p143 = scmp.eq.s32.totalorder %s14, 0
      %p144 = por %p142, %p143
      %p145 = scmp.ne.s32.totalorder %s134, %s137
      %p146 = scmp.eq.s32.totalorder %s19, 1
      %p147 = por %p145, %p146
      %p148 = scmp.ne.s32.totalorder %s137, %s138
      %p149 = scmp.eq.s32.totalorder %s19, 0
      %p150 = por %p148, %p149
      %p151 = scmp.ne.s32.totalorder %s137, %s138
      %p152 = scmp.eq.s32.totalorder %s20, 1
      %p153 = por %p151, %p152
      %p155 = scmp.ne.s32.totalorder %s138, %s154
      %p156 = scmp.eq.s32.totalorder %s20, 0
      %p157 = por %p155, %p156
      %p158 = scmp.le.s32.totalorder 1, %s14
      %p159 = scmp.lt.s32.totalorder %s14, 3
      %p160 = pnand %p158, %p159
      %p161 = pneg %p160
      // Predicated region
      $region9: #{tpu_custom_call.1} parent=5 // pred_check
        _
      $region10: #{tpu_custom_call.1} parent=5 // pred_check_branch
        %163 = sbr.rel (%p160) target = $region12
      $region11: #{tpu_custom_call.1} parent=5 // pred_region
        %s164 = ssub.s32 %s14, 1
        // Predicated region
        $region13: #{tpu_custom_call.1} parent=11 // pred_check
          %p165 = pneg %p61
        $region14: #{tpu_custom_call.1} parent=11 // pred_check_branch
          %167 = sbr.rel (%p165) target = $region16
        $region15: #{tpu_custom_call.1} parent=11 // pred_region
          _
        $region16: #{tpu_custom_call.1} parent=11 // pred_fallthru
          _
        // Predicated region
        $region17: #{tpu_custom_call.1} parent=11 // pred_check
          %p168 = pneg %p82
        $region18: #{tpu_custom_call.1} parent=11 // pred_check_branch
          %170 = sbr.rel (%p168) target = $region20
        $region19: #{tpu_custom_call.1} parent=11 // pred_region
          _
        $region20: #{tpu_custom_call.1} parent=11 // pred_fallthru
          _
        // Predicated region
        $region21: #{tpu_custom_call.1} parent=11 // pred_check
          %p171 = pneg %p103
        $region22: #{tpu_custom_call.1} parent=11 // pred_check_branch
          %173 = sbr.rel (%p171) target = $region24
        $region23: #{tpu_custom_call.1} parent=11 // pred_region
          _
        $region24: #{tpu_custom_call.1} parent=11 // pred_fallthru
          _
        // Predicated region
        $region25: #{tpu_custom_call.1} parent=11 // pred_check
          %p174 = pneg %p124
        $region26: #{tpu_custom_call.1} parent=11 // pred_check_branch
          %176 = sbr.rel (%p174) target = $region28
        $region27: #{tpu_custom_call.1} parent=11 // pred_region
          _
        $region28: #{tpu_custom_call.1} parent=11 // pred_fallthru
          _
      $region12: #{tpu_custom_call.1} parent=5 // pred_fallthru
        _
      %p177 = scmp.lt.s32.totalorder %s14, 2
      // Predicated region
      $region29: #{tpu_custom_call.1} parent=5 // pred_check
        %p178 = pneg %p177
      $region30: #{tpu_custom_call.1} parent=5 // pred_check_branch
        %180 = sbr.rel (%p178) target = $region32
      $region31: #{tpu_custom_call.1} parent=5 // pred_region
        // Predicated region
        $region33: #{tpu_custom_call.1} parent=31 // pred_check
          %p181 = pneg %p34
        $region34: #{tpu_custom_call.1} parent=31 // pred_check_branch
          %183 = sbr.rel (%p181) target = $region36
        $region35: #{tpu_custom_call.1} parent=31 // pred_region
          %s184 = smul.u32 64, %s14
          %p185 = scmp.lt.s32.totalorder %s184, 127
          %s186 = scalar_select %p185, %s184, 127
          %s187 = smul.addr %s186, 4
          %s188 = scalar_lea.vmem %s0, %s187
          %s189 = smul.u32 64, %s14
        $region36: #{tpu_custom_call.1} parent=31 // pred_fallthru
          _
      $region32: #{tpu_custom_call.1} parent=5 // pred_fallthru
        _
      %p190 = scmp.le.s32.totalorder 1, %s14
      %p191 = scmp.lt.s32.totalorder %s14, 3
      %p192 = pnand %p190, %p191
      %p193 = pneg %p192
      // Predicated region
      $region37: #{tpu_custom_call.1} parent=5 // pred_check
        _
      $region38: #{tpu_custom_call.1} parent=5 // pred_check_branch
        %195 = sbr.rel (%p192) target = $region40
      $region39: #{tpu_custom_call.1} parent=5 // pred_region
        %s196 = ssub.s32 %s14, 1
        %s197 = smul.u32 64, %s19
        %p198 = scmp.lt.s32.totalorder %s197, 127
        %s199 = scalar_select %p198, %s197, 127
        %s200 = smul.addr %s199, 4
        %s201 = scalar_lea.vmem %s0, %s200
        %p202 = pneg %p40
        %p203 = pneg %p37
        %p204 = pneg %p61
        %p205 = pneg %p58
        %p206 = pneg %p82
        %p207 = pneg %p79
        %p208 = pneg %p103
        %p209 = pneg %p100
        %p210 = pneg %p124
        %p211 = pneg %p121
        %p212 = pneg %p150
        %p213 = pneg %p147
        %s214 = sand.u32 %s137, 1
        %s215 = scalar_lea.sflag [#allocation3], %s214
        %s216 = sand.u32 %s137, 1
        %s217 = smul.addr %s216, 512
        %s218 = scalar_lea.vmem [#allocation2], %s217
        %s219 = smul.u32 64, %s19
        %p220 = scmp.lt.s32.totalorder %s219, 127
        %s221 = scalar_select %p220, %s219, 127
        %s222 = smul.addr %s221, 4
        %s223 = scalar_lea.vmem %s0, %s222
        %s224 = smul.u32 64, %s19
        %s225 = smul.u32 64, %s19
        %v227 = vld [vmem:[%s223] sm:$0xf]
        %v228 = vld [vmem:[%s223 + $0x4] sm:$0xf]
        %v229 = vld [vmem:[%s223 + $0x8] sm:$0xf]
        %v230 = vld [vmem:[%s223 + $0xc] sm:$0xf]
        %v231 = vld [vmem:[%s223 + $0x10] sm:$0xf]
        %v232 = vld [vmem:[%s223 + $0x14] sm:$0xf]
        %v233 = vld [vmem:[%s223 + $0x18] sm:$0xf]
        %v234 = vld [vmem:[%s223 + $0x1c] sm:$0xf]
        %v235 = vld [vmem:[%s223 + $0x20] sm:$0xf]
        %v236 = vld [vmem:[%s223 + $0x24] sm:$0xf]
        %v237 = vld [vmem:[%s223 + $0x28] sm:$0xf]
        %v238 = vld [vmem:[%s223 + $0x2c] sm:$0xf]
        %v239 = vld [vmem:[%s223 + $0x30] sm:$0xf]
        %v240 = vld [vmem:[%s223 + $0x34] sm:$0xf]
        %v241 = vld [vmem:[%s223 + $0x38] sm:$0xf]
        %v242 = vld [vmem:[%s223 + $0x3c] sm:$0xf]
        %v243 = vld [vmem:[%s223 + $0x40] sm:$0xf]
        %v244 = vld [vmem:[%s223 + $0x44] sm:$0xf]
        %v245 = vld [vmem:[%s223 + $0x48] sm:$0xf]
        %v246 = vld [vmem:[%s223 + $0x4c] sm:$0xf]
        %v247 = vld [vmem:[%s223 + $0x50] sm:$0xf]
        %v248 = vld [vmem:[%s223 + $0x54] sm:$0xf]
        %v249 = vld [vmem:[%s223 + $0x58] sm:$0xf]
        %v250 = vld [vmem:[%s223 + $0x5c] sm:$0xf]
        %v251 = vld [vmem:[%s223 + $0x60] sm:$0xf]
        %v252 = vld [vmem:[%s223 + $0x64] sm:$0xf]
        %v253 = vld [vmem:[%s223 + $0x68] sm:$0xf]
        %v254 = vld [vmem:[%s223 + $0x6c] sm:$0xf]
        %v255 = vld [vmem:[%s223 + $0x70] sm:$0xf]
        %v256 = vld [vmem:[%s223 + $0x74] sm:$0xf]
        %v257 = vld [vmem:[%s223 + $0x78] sm:$0xf]
        %v258 = vld [vmem:[%s223 + $0x7c] sm:$0xf]
        %v259 = vld [vmem:[%s223 + $0x80] sm:$0xf]
        %v260 = vld [vmem:[%s223 + $0x84] sm:$0xf]
        %v261 = vld [vmem:[%s223 + $0x88] sm:$0xf]
        %v262 = vld [vmem:[%s223 + $0x8c] sm:$0xf]
        %v263 = vld [vmem:[%s223 + $0x90] sm:$0xf]
        %v264 = vld [vmem:[%s223 + $0x94] sm:$0xf]
        %v265 = vld [vmem:[%s223 + $0x98] sm:$0xf]
        %v266 = vld [vmem:[%s223 + $0x9c] sm:$0xf]
        %v267 = vld [vmem:[%s223 + $0xa0] sm:$0xf]
        %v268 = vld [vmem:[%s223 + $0xa4] sm:$0xf]
        %v269 = vld [vmem:[%s223 + $0xa8] sm:$0xf]
        %v270 = vld [vmem:[%s223 + $0xac] sm:$0xf]
        %v271 = vld [vmem:[%s223 + $0xb0] sm:$0xf]
        %v272 = vld [vmem:[%s223 + $0xb4] sm:$0xf]
        %v273 = vld [vmem:[%s223 + $0xb8] sm:$0xf]
        %v274 = vld [vmem:[%s223 + $0xbc] sm:$0xf]
        %v275 = vld [vmem:[%s223 + $0xc0] sm:$0xf]
        %v276 = vld [vmem:[%s223 + $0xc4] sm:$0xf]
        %v277 = vld [vmem:[%s223 + $0xc8] sm:$0xf]
        %v278 = vld [vmem:[%s223 + $0xcc] sm:$0xf]
        %v279 = vld [vmem:[%s223 + $0xd0] sm:$0xf]
        %v280 = vld [vmem:[%s223 + $0xd4] sm:$0xf]
        %v281 = vld [vmem:[%s223 + $0xd8] sm:$0xf]
        %v282 = vld [vmem:[%s223 + $0xdc] sm:$0xf]
        %v283 = vld [vmem:[%s223 + $0xe0] sm:$0xf]
        %v284 = vld [vmem:[%s223 + $0xe4] sm:$0xf]
        %v285 = vld [vmem:[%s223 + $0xe8] sm:$0xf]
        %v286 = vld [vmem:[%s223 + $0xec] sm:$0xf]
        %v287 = vld [vmem:[%s223 + $0xf0] sm:$0xf]
        %v288 = vld [vmem:[%s223 + $0xf4] sm:$0xf]
        %v289 = vld [vmem:[%s223 + $0xf8] sm:$0xf]
        %v290 = vld [vmem:[%s223 + $0xfc] sm:$0xf]
        %v291 = vld [vmem:[%s1] sm:$0xf]
        %v292 = vld [vmem:[%s1 + $0x4] sm:$0xf]
        %v293 = vld [vmem:[%s2] sm:$0x1]
        %v295 = vlaneseq
        %v296 = vshrl.u32 %v295, 7
        %v297 = vsub.s32 0, %v296
        %v298 = vrot.slane %v293, %v297
        %v364 = vunpack.c.l.b16 %v227
        %v365 = vunpack.c.l.b16 %v228
        %v366 = vunpack.c.l.b16 %v229
        %v367 = vunpack.c.l.b16 %v230
        %v368 = vunpack.c.l.b16 %v231
        %v369 = vunpack.c.l.b16 %v232
        %v370 = vunpack.c.l.b16 %v233
        %v371 = vunpack.c.l.b16 %v234
        %v372 = vunpack.c.l.b16 %v235
        %v373 = vunpack.c.l.b16 %v236
        %v374 = vunpack.c.l.b16 %v237
        %v375 = vunpack.c.l.b16 %v238
        %v376 = vunpack.c.l.b16 %v239
        %v377 = vunpack.c.l.b16 %v240
        %v378 = vunpack.c.l.b16 %v241
        %v379 = vunpack.c.l.b16 %v242
        %v380 = vunpack.c.l.b16 %v243
        %v381 = vunpack.c.l.b16 %v244
        %v382 = vunpack.c.l.b16 %v245
        %v383 = vunpack.c.l.b16 %v246
        %v384 = vunpack.c.l.b16 %v247
        %v385 = vunpack.c.l.b16 %v248
        %v386 = vunpack.c.l.b16 %v249
        %v387 = vunpack.c.l.b16 %v250
        %v388 = vunpack.c.l.b16 %v251
        %v389 = vunpack.c.l.b16 %v252
        %v390 = vunpack.c.l.b16 %v253
        %v391 = vunpack.c.l.b16 %v254
        %v392 = vunpack.c.l.b16 %v255
        %v393 = vunpack.c.l.b16 %v256
        %v394 = vunpack.c.l.b16 %v257
        %v395 = vunpack.c.l.b16 %v258
        %v396 = vunpack.c.l.b16 %v259
        %v397 = vunpack.c.l.b16 %v260
        %v398 = vunpack.c.l.b16 %v261
        %v399 = vunpack.c.l.b16 %v262
        %v400 = vunpack.c.l.b16 %v263
        %v401 = vunpack.c.l.b16 %v264
        %v402 = vunpack.c.l.b16 %v265
        %v403 = vunpack.c.l.b16 %v266
        %v404 = vunpack.c.l.b16 %v267
        %v405 = vunpack.c.l.b16 %v268
        %v406 = vunpack.c.l.b16 %v269
        %v407 = vunpack.c.l.b16 %v270
        %v408 = vunpack.c.l.b16 %v271
        %v409 = vunpack.c.l.b16 %v272
        %v410 = vunpack.c.l.b16 %v273
        %v411 = vunpack.c.l.b16 %v274
        %v412 = vunpack.c.l.b16 %v275
        %v413 = vunpack.c.l.b16 %v276
        %v414 = vunpack.c.l.b16 %v277
        %v415 = vunpack.c.l.b16 %v278
        %v416 = vunpack.c.l.b16 %v279
        %v417 = vunpack.c.l.b16 %v280
        %v418 = vunpack.c.l.b16 %v281
        %v419 = vunpack.c.l.b16 %v282
        %v420 = vunpack.c.l.b16 %v283
        %v421 = vunpack.c.l.b16 %v284
        %v422 = vunpack.c.l.b16 %v285
        %v423 = vunpack.c.l.b16 %v286
        %v424 = vunpack.c.l.b16 %v287
        %v425 = vunpack.c.l.b16 %v288
        %v426 = vunpack.c.l.b16 %v289
        %v427 = vunpack.c.l.b16 %v290
        %v428 = vpack.c.b16 %v365, %v364
        %v429 = vpack.c.b16 %v367, %v366
        %v430 = vpack.c.b16 %v369, %v368
        %v431 = vpack.c.b16 %v371, %v370
        %v432 = vpack.c.b16 %v373, %v372
        %v433 = vpack.c.b16 %v375, %v374
        %v434 = vpack.c.b16 %v377, %v376
        %v435 = vpack.c.b16 %v379, %v378
        %v436 = vpack.c.b16 %v381, %v380
        %v437 = vpack.c.b16 %v383, %v382
        %v438 = vpack.c.b16 %v385, %v384
        %v439 = vpack.c.b16 %v387, %v386
        %v440 = vpack.c.b16 %v389, %v388
        %v441 = vpack.c.b16 %v391, %v390
        %v442 = vpack.c.b16 %v393, %v392
        %v443 = vpack.c.b16 %v395, %v394
        %v444 = vpack.c.b16 %v397, %v396
        %v445 = vpack.c.b16 %v399, %v398
        %v446 = vpack.c.b16 %v401, %v400
        %v447 = vpack.c.b16 %v403, %v402
        %v448 = vpack.c.b16 %v405, %v404
        %v449 = vpack.c.b16 %v407, %v406
        %v450 = vpack.c.b16 %v409, %v408
        %v451 = vpack.c.b16 %v411, %v410
        %v452 = vpack.c.b16 %v413, %v412
        %v453 = vpack.c.b16 %v415, %v414
        %v454 = vpack.c.b16 %v417, %v416
        %v455 = vpack.c.b16 %v419, %v418
        %v456 = vpack.c.b16 %v421, %v420
        %v457 = vpack.c.b16 %v423, %v422
        %v458 = vpack.c.b16 %v425, %v424
        %v459 = vpack.c.b16 %v427, %v426
        %v462 = vunpack.c.l.b16 %v291
        %v463 = vunpack.c.l.b16 %v292
        %v464 = vpack.c.b16 %v463, %v462
        %vm466 = vcmask 130048
        %v468 = vsel %vm466, %v428, 0
        %v471 = vsel %vm466, %v429, 0
        %v474 = vsel %vm466, %v430, 0
        %v477 = vsel %vm466, %v431, 0
        %v480 = vsel %vm466, %v432, 0
        %v483 = vsel %vm466, %v433, 0
        %v486 = vsel %vm466, %v434, 0
        %v489 = vsel %vm466, %v435, 0
        %v492 = vsel %vm466, %v436, 0
        %v495 = vsel %vm466, %v437, 0
        %v498 = vsel %vm466, %v438, 0
        %v501 = vsel %vm466, %v439, 0
        %v504 = vsel %vm466, %v440, 0
        %v507 = vsel %vm466, %v441, 0
        %v510 = vsel %vm466, %v442, 0
        %v513 = vsel %vm466, %v443, 0
        %v516 = vsel %vm466, %v444, 0
        %v519 = vsel %vm466, %v445, 0
        %v522 = vsel %vm466, %v446, 0
        %v525 = vsel %vm466, %v447, 0
        %v528 = vsel %vm466, %v448, 0
        %v531 = vsel %vm466, %v449, 0
        %v534 = vsel %vm466, %v450, 0
        %v537 = vsel %vm466, %v451, 0
        %v540 = vsel %vm466, %v452, 0
        %v543 = vsel %vm466, %v453, 0
        %v546 = vsel %vm466, %v454, 0
        %v549 = vsel %vm466, %v455, 0
        %v552 = vsel %vm466, %v456, 0
        %v555 = vsel %vm466, %v457, 0
        %v558 = vsel %vm466, %v458, 0
        %v561 = vsel %vm466, %v459, 0
        %563 = vmatprep.subr.bf16.mxu0 0
        %564 = vmatpush1.bf16.msra.mxu0 %v464
        %565 = vmatprep.subr.bf16.mxu0 0
        %566 = vmatpush1.bf16.msra.mxu0 0
        %567 = vmatprep.subr.bf16.mxu0 0
        %568 = vmatpush1.bf16.msra.mxu0 0
        %569 = vmatprep.subr.bf16.mxu0 0
        %570 = vmatpush1.bf16.msra.mxu0 0
        %571 = vmatprep.subr.bf16.mxu0 0
        %572 = vmatpush1.bf16.msra.mxu0 0
        %573 = vmatprep.subr.bf16.mxu0 0
        %574 = vmatpush1.bf16.msra.mxu0 0
        %575 = vmatprep.subr.bf16.mxu0 0
        %576 = vmatpush1.bf16.msra.mxu0 0
        %577 = vmatprep.subr.bf16.mxu0 0
        %578 = vmatpush1.bf16.msra.mxu0 0
        %579 = vmatprep.subr.bf16.mxu0 0
        %580 = vmatpush1.bf16.msra.mxu0 0
        %581 = vmatprep.subr.bf16.mxu0 0
        %582 = vmatpush1.bf16.msra.mxu0 0
        %583 = vmatprep.subr.bf16.mxu0 0
        %584 = vmatpush1.bf16.msra.mxu0 0
        %585 = vmatprep.subr.bf16.mxu0 0
        %586 = vmatpush1.bf16.msra.mxu0 0
        %587 = vmatprep.subr.bf16.mxu0 0
        %588 = vmatpush1.bf16.msra.mxu0 0
        %589 = vmatprep.subr.bf16.mxu0 0
        %590 = vmatpush1.bf16.msra.mxu0 0
        %591 = vmatprep.subr.bf16.mxu0 0
        %592 = vmatpush1.bf16.msra.mxu0 0
        %593 = vmatprep.subr.bf16.mxu0 0
        %594 = vmatpush1.bf16.msra.mxu0 0
        %595 = vmatprep.mubr.bf16.mxu0 0
        %596 = vmatmul.mubr.bf16.gmra.mrb[0].mxu0 %v468
        %v597 = vpop.f32.mrb[0].mxu0
        %v598 = vadd.f32 %v298, %v597
        %v599 = vpop.f32.mrb[0].mxu0
        %v600 = vpop.f32.mrb[0].mxu0
        %v601 = vadd.f32 %v298, %v600
        %v602 = vpop.f32.mrb[0].mxu0
        %603 = vmatprep.mubr.bf16.mxu0 0
        %604 = vmatmul.mubr.bf16.gmra.mrb[0].mxu0 %v471
        %v605 = vpop.f32.mrb[0].mxu0
        %v606 = vadd.f32 %v298, %v605
        %v607 = vpop.f32.mrb[0].mxu0
        %v608 = vpop.f32.mrb[0].mxu0
        %v609 = vadd.f32 %v298, %v608
        %v610 = vpop.f32.mrb[0].mxu0
        %611 = vmatprep.mubr.bf16.mxu0 0
        %612 = vmatmul.mubr.bf16.gmra.mrb[0].mxu0 %v474
        %v613 = vpop.f32.mrb[0].mxu0
        %v614 = vadd.f32 %v298, %v613
        %v615 = vpop.f32.mrb[0].mxu0
        %v616 = vpop.f32.mrb[0].mxu0
        %v617 = vadd.f32 %v298, %v616
        %v618 = vpop.f32.mrb[0].mxu0
        %619 = vmatprep.mubr.bf16.mxu0 0
        %620 = vmatmul.mubr.bf16.gmra.mrb[0].mxu0 %v477
        %v621 = vpop.f32.mrb[0].mxu0
        %v622 = vadd.f32 %v298, %v621
        %v623 = vpop.f32.mrb[0].mxu0
        %v624 = vpop.f32.mrb[0].mxu0
        %v625 = vadd.f32 %v298, %v624
        %v626 = vpop.f32.mrb[0].mxu0
        %627 = vmatprep.mubr.bf16.mxu0 0
        %628 = vmatmul.mubr.bf16.gmra.mrb[0].mxu0 %v480
        %v629 = vpop.f32.mrb[0].mxu0
        %v630 = vadd.f32 %v298, %v629
        %v631 = vpop.f32.mrb[0].mxu0
        %v632 = vpop.f32.mrb[0].mxu0
        %v633 = vadd.f32 %v298, %v632
        %v634 = vpop.f32.mrb[0].mxu0
        %635 = vmatprep.mubr.bf16.mxu0 0
        %636 = vmatmul.mubr.bf16.gmra.mrb[0].mxu0 %v483
        %v637 = vpop.f32.mrb[0].mxu0
        %v638 = vadd.f32 %v298, %v637
        %v639 = vpop.f32.mrb[0].mxu0
        %v640 = vpop.f32.mrb[0].mxu0
        %v641 = vadd.f32 %v298, %v640
        %v642 = vpop.f32.mrb[0].mxu0
        %643 = vmatprep.mubr.bf16.mxu0 0
        %644 = vmatmul.mubr.bf16.gmra.mrb[0].mxu0 %v486
        %v645 = vpop.f32.mrb[0].mxu0
        %v646 = vadd.f32 %v298, %v645
        %v647 = vpop.f32.mrb[0].mxu0
        %v648 = vpop.f32.mrb[0].mxu0
        %v649 = vadd.f32 %v298, %v648
        %v650 = vpop.f32.mrb[0].mxu0
        %651 = vmatprep.mubr.bf16.mxu0 0
        %652 = vmatmul.mubr.bf16.gmra.mrb[0].mxu0 %v489
        %v653 = vpop.f32.mrb[0].mxu0
        %v654 = vadd.f32 %v298, %v653
        %v655 = vpop.f32.mrb[0].mxu0
        %v656 = vpop.f32.mrb[0].mxu0
        %v657 = vadd.f32 %v298, %v656
        %v658 = vpop.f32.mrb[0].mxu0
        %659 = vmatprep.mubr.bf16.mxu0 0
        %660 = vmatmul.mubr.bf16.gmra.mrb[0].mxu0 %v492
        %v661 = vpop.f32.mrb[0].mxu0
        %v662 = vadd.f32 %v298, %v661
        %v663 = vpop.f32.mrb[0].mxu0
        %v664 = vpop.f32.mrb[0].mxu0
        %v665 = vadd.f32 %v298, %v664
        %v666 = vpop.f32.mrb[0].mxu0
        %667 = vmatprep.mubr.bf16.mxu0 0
        %668 = vmatmul.mubr.bf16.gmra.mrb[0].mxu0 %v495
        %v669 = vpop.f32.mrb[0].mxu0
        %v670 = vadd.f32 %v298, %v669
        %v671 = vpop.f32.mrb[0].mxu0
        %v672 = vpop.f32.mrb[0].mxu0
        %v673 = vadd.f32 %v298, %v672
        %v674 = vpop.f32.mrb[0].mxu0
        %675 = vmatprep.mubr.bf16.mxu0 0
        %676 = vmatmul.mubr.bf16.gmra.mrb[0].mxu0 %v498
        %v677 = vpop.f32.mrb[0].mxu0
        %v678 = vadd.f32 %v298, %v677
        %v679 = vpop.f32.mrb[0].mxu0
        %v680 = vpop.f32.mrb[0].mxu0
        %v681 = vadd.f32 %v298, %v680
        %v682 = vpop.f32.mrb[0].mxu0
        %683 = vmatprep.mubr.bf16.mxu0 0
        %684 = vmatmul.mubr.bf16.gmra.mrb[0].mxu0 %v501
        %v685 = vpop.f32.mrb[0].mxu0
        %v686 = vadd.f32 %v298, %v685
        %v687 = vpop.f32.mrb[0].mxu0
        %v688 = vpop.f32.mrb[0].mxu0
        %v689 = vadd.f32 %v298, %v688
        %v690 = vpop.f32.mrb[0].mxu0
        %691 = vmatprep.mubr.bf16.mxu0 0
        %692 = vmatmul.mubr.bf16.gmra.mrb[0].mxu0 %v504
        %v693 = vpop.f32.mrb[0].mxu0
        %v694 = vadd.f32 %v298, %v693
        %v695 = vpop.f32.mrb[0].mxu0
        %v696 = vpop.f32.mrb[0].mxu0
        %v697 = vadd.f32 %v298, %v696
        %v698 = vpop.f32.mrb[0].mxu0
        %699 = vmatprep.mubr.bf16.mxu0 0
        %700 = vmatmul.mubr.bf16.gmra.mrb[0].mxu0 %v507
        %v701 = vpop.f32.mrb[0].mxu0
        %v702 = vadd.f32 %v298, %v701
        %v703 = vpop.f32.mrb[0].mxu0
        %v704 = vpop.f32.mrb[0].mxu0
        %v705 = vadd.f32 %v298, %v704
        %v706 = vpop.f32.mrb[0].mxu0
        %707 = vmatprep.mubr.bf16.mxu0 0
        %708 = vmatmul.mubr.bf16.gmra.mrb[0].mxu0 %v510
        %v709 = vpop.f32.mrb[0].mxu0
        %v710 = vadd.f32 %v298, %v709
        %v711 = vpop.f32.mrb[0].mxu0
        %v712 = vpop.f32.mrb[0].mxu0
        %v713 = vadd.f32 %v298, %v712
        %v714 = vpop.f32.mrb[0].mxu0
        %715 = vmatprep.mubr.bf16.mxu0 0
        %716 = vmatmul.mubr.bf16.gmra.mrb[0].mxu0 %v513
        %v717 = vpop.f32.mrb[0].mxu0
        %v718 = vadd.f32 %v298, %v717
        %v719 = vpop.f32.mrb[0].mxu0
        %v720 = vpop.f32.mrb[0].mxu0
        %v721 = vadd.f32 %v298, %v720
        %v722 = vpop.f32.mrb[0].mxu0
        %723 = vmatprep.mubr.bf16.mxu0 0
        %724 = vmatmul.mubr.bf16.gmra.mrb[0].mxu0 %v516
        %v725 = vpop.f32.mrb[0].mxu0
        %v726 = vadd.f32 %v298, %v725
        %v727 = vpop.f32.mrb[0].mxu0
        %v728 = vpop.f32.mrb[0].mxu0
        %v729 = vadd.f32 %v298, %v728
        %v730 = vpop.f32.mrb[0].mxu0
        %731 = vmatprep.mubr.bf16.mxu0 0
        %732 = vmatmul.mubr.bf16.gmra.mrb[0].mxu0 %v519
        %v733 = vpop.f32.mrb[0].mxu0
        %v734 = vadd.f32 %v298, %v733
        %v735 = vpop.f32.mrb[0].mxu0
        %v736 = vpop.f32.mrb[0].mxu0
        %v737 = vadd.f32 %v298, %v736
        %v738 = vpop.f32.mrb[0].mxu0
        %739 = vmatprep.mubr.bf16.mxu0 0
        %740 = vmatmul.mubr.bf16.gmra.mrb[0].mxu0 %v522
        %v741 = vpop.f32.mrb[0].mxu0
        %v742 = vadd.f32 %v298, %v741
        %v743 = vpop.f32.mrb[0].mxu0
        %v744 = vpop.f32.mrb[0].mxu0
        %v745 = vadd.f32 %v298, %v744
        %v746 = vpop.f32.mrb[0].mxu0
        %747 = vmatprep.mubr.bf16.mxu0 0
        %748 = vmatmul.mubr.bf16.gmra.mrb[0].mxu0 %v525
        %v749 = vpop.f32.mrb[0].mxu0
        %v750 = vadd.f32 %v298, %v749
        %v751 = vpop.f32.mrb[0].mxu0
        %v752 = vpop.f32.mrb[0].mxu0
        %v753 = vadd.f32 %v298, %v752
        %v754 = vpop.f32.mrb[0].mxu0
        %755 = vmatprep.mubr.bf16.mxu0 0
        %756 = vmatmul.mubr.bf16.gmra.mrb[0].mxu0 %v528
        %v757 = vpop.f32.mrb[0].mxu0
        %v758 = vadd.f32 %v298, %v757
        %v759 = vpop.f32.mrb[0].mxu0
        %v760 = vpop.f32.mrb[0].mxu0
        %v761 = vadd.f32 %v298, %v760
        %v762 = vpop.f32.mrb[0].mxu0
        %763 = vmatprep.mubr.bf16.mxu0 0
        %764 = vmatmul.mubr.bf16.gmra.mrb[0].mxu0 %v531
        %v765 = vpop.f32.mrb[0].mxu0
        %v766 = vadd.f32 %v298, %v765
        %v767 = vpop.f32.mrb[0].mxu0
        %v768 = vpop.f32.mrb[0].mxu0
        %v769 = vadd.f32 %v298, %v768
        %v770 = vpop.f32.mrb[0].mxu0
        %771 = vmatprep.mubr.bf16.mxu0 0
        %772 = vmatmul.mubr.bf16.gmra.mrb[0].mxu0 %v534
        %v773 = vpop.f32.mrb[0].mxu0
        %v774 = vadd.f32 %v298, %v773
        %v775 = vpop.f32.mrb[0].mxu0
        %v776 = vpop.f32.mrb[0].mxu0
        %v777 = vadd.f32 %v298, %v776
        %v778 = vpop.f32.mrb[0].mxu0
        %779 = vmatprep.mubr.bf16.mxu0 0
        %780 = vmatmul.mubr.bf16.gmra.mrb[0].mxu0 %v537
        %v781 = vpop.f32.mrb[0].mxu0
        %v782 = vadd.f32 %v298, %v781
        %v783 = vpop.f32.mrb[0].mxu0
        %v784 = vpop.f32.mrb[0].mxu0
        %v785 = vadd.f32 %v298, %v784
        %v786 = vpop.f32.mrb[0].mxu0
        %787 = vmatprep.mubr.bf16.mxu0 0
        %788 = vmatmul.mubr.bf16.gmra.mrb[0].mxu0 %v540
        %v789 = vpop.f32.mrb[0].mxu0
        %v790 = vadd.f32 %v298, %v789
        %v791 = vpop.f32.mrb[0].mxu0
        %v792 = vpop.f32.mrb[0].mxu0
        %v793 = vadd.f32 %v298, %v792
        %v794 = vpop.f32.mrb[0].mxu0
        %795 = vmatprep.mubr.bf16.mxu0 0
        %796 = vmatmul.mubr.bf16.gmra.mrb[0].mxu0 %v543
        %v797 = vpop.f32.mrb[0].mxu0
        %v798 = vadd.f32 %v298, %v797
        %v799 = vpop.f32.mrb[0].mxu0
        %v800 = vpop.f32.mrb[0].mxu0
        %v801 = vadd.f32 %v298, %v800
        %v802 = vpop.f32.mrb[0].mxu0
        %803 = vmatprep.mubr.bf16.mxu0 0
        %804 = vmatmul.mubr.bf16.gmra.mrb[0].mxu0 %v546
        %v805 = vpop.f32.mrb[0].mxu0
        %v806 = vadd.f32 %v298, %v805
        %v807 = vpop.f32.mrb[0].mxu0
        %v808 = vpop.f32.mrb[0].mxu0
        %v809 = vadd.f32 %v298, %v808
        %v810 = vpop.f32.mrb[0].mxu0
        %811 = vmatprep.mubr.bf16.mxu0 0
        %812 = vmatmul.mubr.bf16.gmra.mrb[0].mxu0 %v549
        %v813 = vpop.f32.mrb[0].mxu0
        %v814 = vadd.f32 %v298, %v813
        %v815 = vpop.f32.mrb[0].mxu0
        %v816 = vpop.f32.mrb[0].mxu0
        %v817 = vadd.f32 %v298, %v816
        %v818 = vpop.f32.mrb[0].mxu0
        %819 = vmatprep.mubr.bf16.mxu0 0
        %820 = vmatmul.mubr.bf16.gmra.mrb[0].mxu0 %v552
        %v821 = vpop.f32.mrb[0].mxu0
        %v822 = vadd.f32 %v298, %v821
        %v823 = vpop.f32.mrb[0].mxu0
        %v824 = vpop.f32.mrb[0].mxu0
        %v825 = vadd.f32 %v298, %v824
        %v826 = vpop.f32.mrb[0].mxu0
        %827 = vmatprep.mubr.bf16.mxu0 0
        %828 = vmatmul.mubr.bf16.gmra.mrb[0].mxu0 %v555
        %v829 = vpop.f32.mrb[0].mxu0
        %v830 = vadd.f32 %v298, %v829
        %v831 = vpop.f32.mrb[0].mxu0
        %v832 = vpop.f32.mrb[0].mxu0
        %v833 = vadd.f32 %v298, %v832
        %v834 = vpop.f32.mrb[0].mxu0
        %835 = vmatprep.mubr.bf16.mxu0 0
        %836 = vmatmul.mubr.bf16.gmra.mrb[0].mxu0 %v558
        %v837 = vpop.f32.mrb[0].mxu0
        %v838 = vadd.f32 %v298, %v837
        %v839 = vpop.f32.mrb[0].mxu0
        %v840 = vpop.f32.mrb[0].mxu0
        %v841 = vadd.f32 %v298, %v840
        %v842 = vpop.f32.mrb[0].mxu0
        %843 = vmatprep.mubr.bf16.mxu0 0
        %844 = vmatmul.mubr.bf16.gmra.mrb[0].mxu0 %v561
        %v845 = vpop.f32.mrb[0].mxu0
        %v846 = vadd.f32 %v298, %v845
        %v847 = vpop.f32.mrb[0].mxu0
        %v848 = vpop.f32.mrb[0].mxu0
        %v849 = vadd.f32 %v298, %v848
        %v850 = vpop.f32.mrb[0].mxu0
        %851 = vdwg.mxu0
        %vm852 = vcmp.gt.f32.partialorder %v598, 0.0
        %vm853 = vcmp.gt.f32.partialorder %v601, 0.0
        %vm854 = vcmp.gt.f32.partialorder %v606, 0.0
        %vm855 = vcmp.gt.f32.partialorder %v609, 0.0
        %vm856 = vcmp.gt.f32.partialorder %v614, 0.0
        %vm857 = vcmp.gt.f32.partialorder %v617, 0.0
        %vm858 = vcmp.gt.f32.partialorder %v622, 0.0
        %vm859 = vcmp.gt.f32.partialorder %v625, 0.0
        %vm860 = vcmp.gt.f32.partialorder %v630, 0.0
        %vm861 = vcmp.gt.f32.partialorder %v633, 0.0
        %vm862 = vcmp.gt.f32.partialorder %v638, 0.0
        %vm863 = vcmp.gt.f32.partialorder %v641, 0.0
        %vm864 = vcmp.gt.f32.partialorder %v646, 0.0
        %vm865 = vcmp.gt.f32.partialorder %v649, 0.0
        %vm866 = vcmp.gt.f32.partialorder %v654, 0.0
        %vm867 = vcmp.gt.f32.partialorder %v657, 0.0
        %vm868 = vcmp.gt.f32.partialorder %v662, 0.0
        %vm869 = vcmp.gt.f32.partialorder %v665, 0.0
        %vm870 = vcmp.gt.f32.partialorder %v670, 0.0
        %vm871 = vcmp.gt.f32.partialorder %v673, 0.0
        %vm872 = vcmp.gt.f32.partialorder %v678, 0.0
        %vm873 = vcmp.gt.f32.partialorder %v681, 0.0
        %vm874 = vcmp.gt.f32.partialorder %v686, 0.0
        %vm875 = vcmp.gt.f32.partialorder %v689, 0.0
        %vm876 = vcmp.gt.f32.partialorder %v694, 0.0
        %vm877 = vcmp.gt.f32.partialorder %v697, 0.0
        %vm878 = vcmp.gt.f32.partialorder %v702, 0.0
        %vm879 = vcmp.gt.f32.partialorder %v705, 0.0
        %vm880 = vcmp.gt.f32.partialorder %v710, 0.0
        %vm881 = vcmp.gt.f32.partialorder %v713, 0.0
        %vm882 = vcmp.gt.f32.partialorder %v718, 0.0
        %vm883 = vcmp.gt.f32.partialorder %v721, 0.0
        %vm884 = vcmp.gt.f32.partialorder %v726, 0.0
        %vm885 = vcmp.gt.f32.partialorder %v729, 0.0
        %vm886 = vcmp.gt.f32.partialorder %v734, 0.0
        %vm887 = vcmp.gt.f32.partialorder %v737, 0.0
        %vm888 = vcmp.gt.f32.partialorder %v742, 0.0
        %vm889 = vcmp.gt.f32.partialorder %v745, 0.0
        %vm890 = vcmp.gt.f32.partialorder %v750, 0.0
        %vm891 = vcmp.gt.f32.partialorder %v753, 0.0
        %vm892 = vcmp.gt.f32.partialorder %v758, 0.0
        %vm893 = vcmp.gt.f32.partialorder %v761, 0.0
        %vm894 = vcmp.gt.f32.partialorder %v766, 0.0
        %vm895 = vcmp.gt.f32.partialorder %v769, 0.0
        %vm896 = vcmp.gt.f32.partialorder %v774, 0.0
        %vm897 = vcmp.gt.f32.partialorder %v777, 0.0
        %vm898 = vcmp.gt.f32.partialorder %v782, 0.0
        %vm899 = vcmp.gt.f32.partialorder %v785, 0.0
        %vm900 = vcmp.gt.f32.partialorder %v790, 0.0
        %vm901 = vcmp.gt.f32.partialorder %v793, 0.0
        %vm902 = vcmp.gt.f32.partialorder %v798, 0.0
        %vm903 = vcmp.gt.f32.partialorder %v801, 0.0
        %vm904 = vcmp.gt.f32.partialorder %v806, 0.0
        %vm905 = vcmp.gt.f32.partialorder %v809, 0.0
        %vm906 = vcmp.gt.f32.partialorder %v814, 0.0
        %vm907 = vcmp.gt.f32.partialorder %v817, 0.0
        %vm908 = vcmp.gt.f32.partialorder %v822, 0.0
        %vm909 = vcmp.gt.f32.partialorder %v825, 0.0
        %vm910 = vcmp.gt.f32.partialorder %v830, 0.0
        %vm911 = vcmp.gt.f32.partialorder %v833, 0.0
        %vm912 = vcmp.gt.f32.partialorder %v838, 0.0
        %vm913 = vcmp.gt.f32.partialorder %v841, 0.0
        %vm914 = vcmp.gt.f32.partialorder %v846, 0.0
        %vm915 = vcmp.gt.f32.partialorder %v849, 0.0
        %v916 = vmul.f32 %v598, 0.01
        %v917 = vmul.f32 %v601, 0.01
        %v918 = vmul.f32 %v606, 0.01
        %v919 = vmul.f32 %v609, 0.01
        %v920 = vmul.f32 %v614, 0.01
        %v921 = vmul.f32 %v617, 0.01
        %v922 = vmul.f32 %v622, 0.01
        %v923 = vmul.f32 %v625, 0.01
        %v924 = vmul.f32 %v630, 0.01
        %v925 = vmul.f32 %v633, 0.01
        %v926 = vmul.f32 %v638, 0.01
        %v927 = vmul.f32 %v641, 0.01
        %v928 = vmul.f32 %v646, 0.01
        %v929 = vmul.f32 %v649, 0.01
        %v930 = vmul.f32 %v654, 0.01
        %v931 = vmul.f32 %v657, 0.01
        %v932 = vmul.f32 %v662, 0.01
        %v933 = vmul.f32 %v665, 0.01
        %v934 = vmul.f32 %v670, 0.01
        %v935 = vmul.f32 %v673, 0.01
        %v936 = vmul.f32 %v678, 0.01
        %v937 = vmul.f32 %v681, 0.01
        %v938 = vmul.f32 %v686, 0.01
        %v939 = vmul.f32 %v689, 0.01
        %v940 = vmul.f32 %v694, 0.01
        %v941 = vmul.f32 %v697, 0.01
        %v942 = vmul.f32 %v702, 0.01
        %v943 = vmul.f32 %v705, 0.01
        %v944 = vmul.f32 %v710, 0.01
        %v945 = vmul.f32 %v713, 0.01
        %v946 = vmul.f32 %v718, 0.01
        %v947 = vmul.f32 %v721, 0.01
        %v948 = vmul.f32 %v726, 0.01
        %v949 = vmul.f32 %v729, 0.01
        %v950 = vmul.f32 %v734, 0.01
        %v951 = vmul.f32 %v737, 0.01
        %v952 = vmul.f32 %v742, 0.01
        %v953 = vmul.f32 %v745, 0.01
        %v954 = vmul.f32 %v750, 0.01
        %v955 = vmul.f32 %v753, 0.01
        %v956 = vmul.f32 %v758, 0.01
        %v957 = vmul.f32 %v761, 0.01
        %v958 = vmul.f32 %v766, 0.01
        %v959 = vmul.f32 %v769, 0.01
        %v960 = vmul.f32 %v774, 0.01
        %v961 = vmul.f32 %v777, 0.01
        %v962 = vmul.f32 %v782, 0.01
        %v963 = vmul.f32 %v785, 0.01
        %v964 = vmul.f32 %v790, 0.01
        %v965 = vmul.f32 %v793, 0.01
        %v966 = vmul.f32 %v798, 0.01
        %v967 = vmul.f32 %v801, 0.01
        %v968 = vmul.f32 %v806, 0.01
        %v969 = vmul.f32 %v809, 0.01
        %v970 = vmul.f32 %v814, 0.01
        %v971 = vmul.f32 %v817, 0.01
        %v972 = vmul.f32 %v822, 0.01
        %v973 = vmul.f32 %v825, 0.01
        %v974 = vmul.f32 %v830, 0.01
        %v975 = vmul.f32 %v833, 0.01
        %v976 = vmul.f32 %v838, 0.01
        %v977 = vmul.f32 %v841, 0.01
        %v978 = vmul.f32 %v846, 0.01
        %v979 = vmul.f32 %v849, 0.01
        %v980 = vsel %vm852, %v598, %v916
        %v981 = vsel %vm853, %v601, %v917
        %v982 = vsel %vm854, %v606, %v918
        %v983 = vsel %vm855, %v609, %v919
        %v984 = vsel %vm856, %v614, %v920
        %v985 = vsel %vm857, %v617, %v921
        %v986 = vsel %vm858, %v622, %v922
        %v987 = vsel %vm859, %v625, %v923
        %v988 = vsel %vm860, %v630, %v924
        %v989 = vsel %vm861, %v633, %v925
        %v990 = vsel %vm862, %v638, %v926
        %v991 = vsel %vm863, %v641, %v927
        %v992 = vsel %vm864, %v646, %v928
        %v993 = vsel %vm865, %v649, %v929
        %v994 = vsel %vm866, %v654, %v930
        %v995 = vsel %vm867, %v657, %v931
        %v996 = vsel %vm868, %v662, %v932
        %v997 = vsel %vm869, %v665, %v933
        %v998 = vsel %vm870, %v670, %v934
        %v999 = vsel %vm871, %v673, %v935
        %v1000 = vsel %vm872, %v678, %v936
        %v1001 = vsel %vm873, %v681, %v937
        %v1002 = vsel %vm874, %v686, %v938
        %v1003 = vsel %vm875, %v689, %v939
        %v1004 = vsel %vm876, %v694, %v940
        %v1005 = vsel %vm877, %v697, %v941
        %v1006 = vsel %vm878, %v702, %v942
        %v1007 = vsel %vm879, %v705, %v943
        %v1008 = vsel %vm880, %v710, %v944
        %v1009 = vsel %vm881, %v713, %v945
        %v1010 = vsel %vm882, %v718, %v946
        %v1011 = vsel %vm883, %v721, %v947
        %v1012 = vsel %vm884, %v726, %v948
        %v1013 = vsel %vm885, %v729, %v949
        %v1014 = vsel %vm886, %v734, %v950
        %v1015 = vsel %vm887, %v737, %v951
        %v1016 = vsel %vm888, %v742, %v952
        %v1017 = vsel %vm889, %v745, %v953
        %v1018 = vsel %vm890, %v750, %v954
        %v1019 = vsel %vm891, %v753, %v955
        %v1020 = vsel %vm892, %v758, %v956
        %v1021 = vsel %vm893, %v761, %v957
        %v1022 = vsel %vm894, %v766, %v958
        %v1023 = vsel %vm895, %v769, %v959
        %v1024 = vsel %vm896, %v774, %v960
        %v1025 = vsel %vm897, %v777, %v961
        %v1026 = vsel %vm898, %v782, %v962
        %v1027 = vsel %vm899, %v785, %v963
        %v1028 = vsel %vm900, %v790, %v964
        %v1029 = vsel %vm901, %v793, %v965
        %v1030 = vsel %vm902, %v798, %v966
        %v1031 = vsel %vm903, %v801, %v967
        %v1032 = vsel %vm904, %v806, %v968
        %v1033 = vsel %vm905, %v809, %v969
        %v1034 = vsel %vm906, %v814, %v970
        %v1035 = vsel %vm907, %v817, %v971
        %v1036 = vsel %vm908, %v822, %v972
        %v1037 = vsel %vm909, %v825, %v973
        %v1038 = vsel %vm910, %v830, %v974
        %v1039 = vsel %vm911, %v833, %v975
        %v1040 = vsel %vm912, %v838, %v976
        %v1041 = vsel %vm913, %v841, %v977
        %v1042 = vsel %vm914, %v846, %v978
        %v1043 = vsel %vm915, %v849, %v979
        %v1044 = vpack.c.bf16 %v981, %v980
        %v1045 = vpack.c.bf16 %v983, %v982
        %v1046 = vpack.c.bf16 %v985, %v984
        %v1047 = vpack.c.bf16 %v987, %v986
        %v1048 = vpack.c.bf16 %v989, %v988
        %v1049 = vpack.c.bf16 %v991, %v990
        %v1050 = vpack.c.bf16 %v993, %v992
        %v1051 = vpack.c.bf16 %v995, %v994
        %v1052 = vpack.c.bf16 %v997, %v996
        %v1053 = vpack.c.bf16 %v999, %v998
        %v1054 = vpack.c.bf16 %v1001, %v1000
        %v1055 = vpack.c.bf16 %v1003, %v1002
        %v1056 = vpack.c.bf16 %v1005, %v1004
        %v1057 = vpack.c.bf16 %v1007, %v1006
        %v1058 = vpack.c.bf16 %v1009, %v1008
        %v1059 = vpack.c.bf16 %v1011, %v1010
        %v1060 = vpack.c.bf16 %v1013, %v1012
        %v1061 = vpack.c.bf16 %v1015, %v1014
        %v1062 = vpack.c.bf16 %v1017, %v1016
        %v1063 = vpack.c.bf16 %v1019, %v1018
        %v1064 = vpack.c.bf16 %v1021, %v1020
        %v1065 = vpack.c.bf16 %v1023, %v1022
        %v1066 = vpack.c.bf16 %v1025, %v1024
        %v1067 = vpack.c.bf16 %v1027, %v1026
        %v1068 = vpack.c.bf16 %v1029, %v1028
        %v1069 = vpack.c.bf16 %v1031, %v1030
        %v1070 = vpack.c.bf16 %v1033, %v1032
        %v1071 = vpack.c.bf16 %v1035, %v1034
        %v1072 = vpack.c.bf16 %v1037, %v1036
        %v1073 = vpack.c.bf16 %v1039, %v1038
        %v1074 = vpack.c.bf16 %v1041, %v1040
        %v1075 = vpack.c.bf16 %v1043, %v1042
        %v1076 = vld [vmem:[%s3] sm:$0xf]
        %v1077 = vld [vmem:[%s3 + $0x4] sm:$0xf]
        %v1078 = vld [vmem:[%s3 + $0x8] sm:$0xf]
        %v1079 = vld [vmem:[%s3 + $0xc] sm:$0xf]
        %v1080 = vld [vmem:[%s3 + $0x10] sm:$0xf]
        %v1081 = vld [vmem:[%s3 + $0x14] sm:$0xf]
        %v1082 = vld [vmem:[%s3 + $0x18] sm:$0xf]
        %v1083 = vld [vmem:[%s3 + $0x1c] sm:$0xf]
        %v1084 = vld [vmem:[%s3 + $0x20] sm:$0xf]
        %v1085 = vld [vmem:[%s3 + $0x24] sm:$0xf]
        %v1086 = vld [vmem:[%s3 + $0x28] sm:$0xf]
        %v1087 = vld [vmem:[%s3 + $0x2c] sm:$0xf]
        %v1088 = vld [vmem:[%s3 + $0x30] sm:$0xf]
        %v1089 = vld [vmem:[%s3 + $0x34] sm:$0xf]
        %v1090 = vld [vmem:[%s3 + $0x38] sm:$0xf]
        %v1091 = vld [vmem:[%s3 + $0x3c] sm:$0xf]
        %v1092 = vld [vmem:[%s4] sm:$0x1]
        %v1094 = vlaneseq
        %v1095 = vshrl.u32 %v1094, 7
        %v1096 = vsub.s32 0, %v1095
        %v1097 = vrot.slane %v1092, %v1096
        %v1115 = vunpack.c.l.b16 %v1076
        %v1116 = vunpack.c.l.b16 %v1077
        %v1117 = vunpack.c.l.b16 %v1078
        %v1118 = vunpack.c.l.b16 %v1079
        %v1119 = vunpack.c.l.b16 %v1080
        %v1120 = vunpack.c.l.b16 %v1081
        %v1121 = vunpack.c.l.b16 %v1082
        %v1122 = vunpack.c.l.b16 %v1083
        %v1123 = vunpack.c.l.b16 %v1084
        %v1124 = vunpack.c.l.b16 %v1085
        %v1125 = vunpack.c.l.b16 %v1086
        %v1126 = vunpack.c.l.b16 %v1087
        %v1127 = vunpack.c.l.b16 %v1088
        %v1128 = vunpack.c.l.b16 %v1089
        %v1129 = vunpack.c.l.b16 %v1090
        %v1130 = vunpack.c.l.b16 %v1091
        %v1131 = vpack.c.b16 %v1116, %v1115
        %v1132 = vpack.c.b16 %v1118, %v1117
        %v1133 = vpack.c.b16 %v1120, %v1119
        %v1134 = vpack.c.b16 %v1122, %v1121
        %v1135 = vpack.c.b16 %v1124, %v1123
        %v1136 = vpack.c.b16 %v1126, %v1125
        %v1137 = vpack.c.b16 %v1128, %v1127
        %v1138 = vpack.c.b16 %v1130, %v1129
        %1147 = vmatprep.subr.bf16.mxu0 0
        %1148 = vmatpush1.bf16.msra.mxu0 %v1131
        %1149 = vmatprep.subr.bf16.mxu0 0
        %1150 = vmatpush1.bf16.msra.mxu0 %v1132
        %1151 = vmatprep.subr.bf16.mxu0 0
        %1152 = vmatpush1.bf16.msra.mxu0 %v1133
        %1153 = vmatprep.subr.bf16.mxu0 0
        %1154 = vmatpush1.bf16.msra.mxu0 %v1134
        %1155 = vmatprep.subr.bf16.mxu0 0
        %1156 = vmatpush1.bf16.msra.mxu0 %v1135
        %1157 = vmatprep.subr.bf16.mxu0 0
        %1158 = vmatpush1.bf16.msra.mxu0 %v1136
        %1159 = vmatprep.subr.bf16.mxu0 0
        %1160 = vmatpush1.bf16.msra.mxu0 %v1137
        %1161 = vmatprep.subr.bf16.mxu0 0
        %1162 = vmatpush1.bf16.msra.mxu0 %v1138
        %1163 = vmatprep.subr.bf16.mxu0 0
        %1164 = vmatpush1.bf16.msra.mxu0 0
        %1165 = vmatprep.subr.bf16.mxu0 0
        %1166 = vmatpush1.bf16.msra.mxu0 0
        %1167 = vmatprep.subr.bf16.mxu0 0
        %1168 = vmatpush1.bf16.msra.mxu0 0
        %1169 = vmatprep.subr.bf16.mxu0 0
        %1170 = vmatpush1.bf16.msra.mxu0 0
        %1171 = vmatprep.subr.bf16.mxu0 0
        %1172 = vmatpush1.bf16.msra.mxu0 0
        %1173 = vmatprep.subr.bf16.mxu0 0
        %1174 = vmatpush1.bf16.msra.mxu0 0
        %1175 = vmatprep.subr.bf16.mxu0 0
        %1176 = vmatpush1.bf16.msra.mxu0 0
        %1177 = vmatprep.subr.bf16.mxu0 0
        %1178 = vmatpush1.bf16.msra.mxu0 0
        %1179 = vmatprep.mubr.bf16.mxu0 0
        %1180 = vmatmul.mubr.bf16.gmra.mrb[0].mxu0 %v1044
        %v1181 = vpop.f32.mrb[0].mxu0
        %v1182 = vadd.f32 %v1097, %v1181
        %v1183 = vpop.f32.mrb[0].mxu0
        %v1184 = vpop.f32.mrb[0].mxu0
        %v1185 = vadd.f32 %v1097, %v1184
        %v1186 = vpop.f32.mrb[0].mxu0
        %1187 = vmatprep.mubr.bf16.mxu0 0
        %1188 = vmatmul.mubr.bf16.gmra.mrb[0].mxu0 %v1045
        %v1189 = vpop.f32.mrb[0].mxu0
        %v1190 = vadd.f32 %v1097, %v1189
        %v1191 = vpop.f32.mrb[0].mxu0
        %v1192 = vpop.f32.mrb[0].mxu0
        %v1193 = vadd.f32 %v1097, %v1192
        %v1194 = vpop.f32.mrb[0].mxu0
        %1195 = vmatprep.mubr.bf16.mxu0 0
        %1196 = vmatmul.mubr.bf16.gmra.mrb[0].mxu0 %v1046
        %v1197 = vpop.f32.mrb[0].mxu0
        %v1198 = vadd.f32 %v1097, %v1197
        %v1199 = vpop.f32.mrb[0].mxu0
        %v1200 = vpop.f32.mrb[0].mxu0
        %v1201 = vadd.f32 %v1097, %v1200
        %v1202 = vpop.f32.mrb[0].mxu0
        %1203 = vmatprep.mubr.bf16.mxu0 0
        %1204 = vmatmul.mubr.bf16.gmra.mrb[0].mxu0 %v1047
        %v1205 = vpop.f32.mrb[0].mxu0
        %v1206 = vadd.f32 %v1097, %v1205
        %v1207 = vpop.f32.mrb[0].mxu0
        %v1208 = vpop.f32.mrb[0].mxu0
        %v1209 = vadd.f32 %v1097, %v1208
        %v1210 = vpop.f32.mrb[0].mxu0
        %1211 = vmatprep.mubr.bf16.mxu0 0
        %1212 = vmatmul.mubr.bf16.gmra.mrb[0].mxu0 %v1048
        %v1213 = vpop.f32.mrb[0].mxu0
        %v1214 = vadd.f32 %v1097, %v1213
        %v1215 = vpop.f32.mrb[0].mxu0
        %v1216 = vpop.f32.mrb[0].mxu0
        %v1217 = vadd.f32 %v1097, %v1216
        %v1218 = vpop.f32.mrb[0].mxu0
        %1219 = vmatprep.mubr.bf16.mxu0 0
        %1220 = vmatmul.mubr.bf16.gmra.mrb[0].mxu0 %v1049
        %v1221 = vpop.f32.mrb[0].mxu0
        %v1222 = vadd.f32 %v1097, %v1221
        %v1223 = vpop.f32.mrb[0].mxu0
        %v1224 = vpop.f32.mrb[0].mxu0
        %v1225 = vadd.f32 %v1097, %v1224
        %v1226 = vpop.f32.mrb[0].mxu0
        %1227 = vmatprep.mubr.bf16.mxu0 0
        %1228 = vmatmul.mubr.bf16.gmra.mrb[0].mxu0 %v1050
        %v1229 = vpop.f32.mrb[0].mxu0
        %v1230 = vadd.f32 %v1097, %v1229
        %v1231 = vpop.f32.mrb[0].mxu0
        %v1232 = vpop.f32.mrb[0].mxu0
        %v1233 = vadd.f32 %v1097, %v1232
        %v1234 = vpop.f32.mrb[0].mxu0
        %1235 = vmatprep.mubr.bf16.mxu0 0
        %1236 = vmatmul.mubr.bf16.gmra.mrb[0].mxu0 %v1051
        %v1237 = vpop.f32.mrb[0].mxu0
        %v1238 = vadd.f32 %v1097, %v1237
        %v1239 = vpop.f32.mrb[0].mxu0
        %v1240 = vpop.f32.mrb[0].mxu0
        %v1241 = vadd.f32 %v1097, %v1240
        %v1242 = vpop.f32.mrb[0].mxu0
        %1243 = vmatprep.mubr.bf16.mxu0 0
        %1244 = vmatmul.mubr.bf16.gmra.mrb[0].mxu0 %v1052
        %v1245 = vpop.f32.mrb[0].mxu0
        %v1246 = vadd.f32 %v1097, %v1245
        %v1247 = vpop.f32.mrb[0].mxu0
        %v1248 = vpop.f32.mrb[0].mxu0
        %v1249 = vadd.f32 %v1097, %v1248
        %v1250 = vpop.f32.mrb[0].mxu0
        %1251 = vmatprep.mubr.bf16.mxu0 0
        %1252 = vmatmul.mubr.bf16.gmra.mrb[0].mxu0 %v1053
        %v1253 = vpop.f32.mrb[0].mxu0
        %v1254 = vadd.f32 %v1097, %v1253
        %v1255 = vpop.f32.mrb[0].mxu0
        %v1256 = vpop.f32.mrb[0].mxu0
        %v1257 = vadd.f32 %v1097, %v1256
        %v1258 = vpop.f32.mrb[0].mxu0
        %1259 = vmatprep.mubr.bf16.mxu0 0
        %1260 = vmatmul.mubr.bf16.gmra.mrb[0].mxu0 %v1054
        %v1261 = vpop.f32.mrb[0].mxu0
        %v1262 = vadd.f32 %v1097, %v1261
        %v1263 = vpop.f32.mrb[0].mxu0
        %v1264 = vpop.f32.mrb[0].mxu0
        %v1265 = vadd.f32 %v1097, %v1264
        %v1266 = vpop.f32.mrb[0].mxu0
        %1267 = vmatprep.mubr.bf16.mxu0 0
        %1268 = vmatmul.mubr.bf16.gmra.mrb[0].mxu0 %v1055
        %v1269 = vpop.f32.mrb[0].mxu0
        %v1270 = vadd.f32 %v1097, %v1269
        %v1271 = vpop.f32.mrb[0].mxu0
        %v1272 = vpop.f32.mrb[0].mxu0
        %v1273 = vadd.f32 %v1097, %v1272
        %v1274 = vpop.f32.mrb[0].mxu0
        %1275 = vmatprep.mubr.bf16.mxu0 0
        %1276 = vmatmul.mubr.bf16.gmra.mrb[0].mxu0 %v1056
        %v1277 = vpop.f32.mrb[0].mxu0
        %v1278 = vadd.f32 %v1097, %v1277
        %v1279 = vpop.f32.mrb[0].mxu0
        %v1280 = vpop.f32.mrb[0].mxu0
        %v1281 = vadd.f32 %v1097, %v1280
        %v1282 = vpop.f32.mrb[0].mxu0
        %1283 = vmatprep.mubr.bf16.mxu0 0
        %1284 = vmatmul.mubr.bf16.gmra.mrb[0].mxu0 %v1057
        %v1285 = vpop.f32.mrb[0].mxu0
        %v1286 = vadd.f32 %v1097, %v1285
        %v1287 = vpop.f32.mrb[0].mxu0
        %v1288 = vpop.f32.mrb[0].mxu0
        %v1289 = vadd.f32 %v1097, %v1288
        %v1290 = vpop.f32.mrb[0].mxu0
        %1291 = vmatprep.mubr.bf16.mxu0 0
        %1292 = vmatmul.mubr.bf16.gmra.mrb[0].mxu0 %v1058
        %v1293 = vpop.f32.mrb[0].mxu0
        %v1294 = vadd.f32 %v1097, %v1293
        %v1295 = vpop.f32.mrb[0].mxu0
        %v1296 = vpop.f32.mrb[0].mxu0
        %v1297 = vadd.f32 %v1097, %v1296
        %v1298 = vpop.f32.mrb[0].mxu0
        %1299 = vmatprep.mubr.bf16.mxu0 0
        %1300 = vmatmul.mubr.bf16.gmra.mrb[0].mxu0 %v1059
        %v1301 = vpop.f32.mrb[0].mxu0
        %v1302 = vadd.f32 %v1097, %v1301
        %v1303 = vpop.f32.mrb[0].mxu0
        %v1304 = vpop.f32.mrb[0].mxu0
        %v1305 = vadd.f32 %v1097, %v1304
        %v1306 = vpop.f32.mrb[0].mxu0
        %1307 = vmatprep.mubr.bf16.mxu0 0
        %1308 = vmatmul.mubr.bf16.gmra.mrb[0].mxu0 %v1060
        %v1309 = vpop.f32.mrb[0].mxu0
        %v1310 = vadd.f32 %v1097, %v1309
        %v1311 = vpop.f32.mrb[0].mxu0
        %v1312 = vpop.f32.mrb[0].mxu0
        %v1313 = vadd.f32 %v1097, %v1312
        %v1314 = vpop.f32.mrb[0].mxu0
        %1315 = vmatprep.mubr.bf16.mxu0 0
        %1316 = vmatmul.mubr.bf16.gmra.mrb[0].mxu0 %v1061
        %v1317 = vpop.f32.mrb[0].mxu0
        %v1318 = vadd.f32 %v1097, %v1317
        %v1319 = vpop.f32.mrb[0].mxu0
        %v1320 = vpop.f32.mrb[0].mxu0
        %v1321 = vadd.f32 %v1097, %v1320
        %v1322 = vpop.f32.mrb[0].mxu0
        %1323 = vmatprep.mubr.bf16.mxu0 0
        %1324 = vmatmul.mubr.bf16.gmra.mrb[0].mxu0 %v1062
        %v1325 = vpop.f32.mrb[0].mxu0
        %v1326 = vadd.f32 %v1097, %v1325
        %v1327 = vpop.f32.mrb[0].mxu0
        %v1328 = vpop.f32.mrb[0].mxu0
        %v1329 = vadd.f32 %v1097, %v1328
        %v1330 = vpop.f32.mrb[0].mxu0
        %1331 = vmatprep.mubr.bf16.mxu0 0
        %1332 = vmatmul.mubr.bf16.gmra.mrb[0].mxu0 %v1063
        %v1333 = vpop.f32.mrb[0].mxu0
        %v1334 = vadd.f32 %v1097, %v1333
        %v1335 = vpop.f32.mrb[0].mxu0
        %v1336 = vpop.f32.mrb[0].mxu0
        %v1337 = vadd.f32 %v1097, %v1336
        %v1338 = vpop.f32.mrb[0].mxu0
        %1339 = vmatprep.mubr.bf16.mxu0 0
        %1340 = vmatmul.mubr.bf16.gmra.mrb[0].mxu0 %v1064
        %v1341 = vpop.f32.mrb[0].mxu0
        %v1342 = vadd.f32 %v1097, %v1341
        %v1343 = vpop.f32.mrb[0].mxu0
        %v1344 = vpop.f32.mrb[0].mxu0
        %v1345 = vadd.f32 %v1097, %v1344
        %v1346 = vpop.f32.mrb[0].mxu0
        %1347 = vmatprep.mubr.bf16.mxu0 0
        %1348 = vmatmul.mubr.bf16.gmra.mrb[0].mxu0 %v1065
        %v1349 = vpop.f32.mrb[0].mxu0
        %v1350 = vadd.f32 %v1097, %v1349
        %v1351 = vpop.f32.mrb[0].mxu0
        %v1352 = vpop.f32.mrb[0].mxu0
        %v1353 = vadd.f32 %v1097, %v1352
        %v1354 = vpop.f32.mrb[0].mxu0
        %1355 = vmatprep.mubr.bf16.mxu0 0
        %1356 = vmatmul.mubr.bf16.gmra.mrb[0].mxu0 %v1066
        %v1357 = vpop.f32.mrb[0].mxu0
        %v1358 = vadd.f32 %v1097, %v1357
        %v1359 = vpop.f32.mrb[0].mxu0
        %v1360 = vpop.f32.mrb[0].mxu0
        %v1361 = vadd.f32 %v1097, %v1360
        %v1362 = vpop.f32.mrb[0].mxu0
        %1363 = vmatprep.mubr.bf16.mxu0 0
        %1364 = vmatmul.mubr.bf16.gmra.mrb[0].mxu0 %v1067
        %v1365 = vpop.f32.mrb[0].mxu0
        %v1366 = vadd.f32 %v1097, %v1365
        %v1367 = vpop.f32.mrb[0].mxu0
        %v1368 = vpop.f32.mrb[0].mxu0
        %v1369 = vadd.f32 %v1097, %v1368
        %v1370 = vpop.f32.mrb[0].mxu0
        %1371 = vmatprep.mubr.bf16.mxu0 0
        %1372 = vmatmul.mubr.bf16.gmra.mrb[0].mxu0 %v1068
        %v1373 = vpop.f32.mrb[0].mxu0
        %v1374 = vadd.f32 %v1097, %v1373
        %v1375 = vpop.f32.mrb[0].mxu0
        %v1376 = vpop.f32.mrb[0].mxu0
        %v1377 = vadd.f32 %v1097, %v1376
        %v1378 = vpop.f32.mrb[0].mxu0
        %1379 = vmatprep.mubr.bf16.mxu0 0
        %1380 = vmatmul.mubr.bf16.gmra.mrb[0].mxu0 %v1069
        %v1381 = vpop.f32.mrb[0].mxu0
        %v1382 = vadd.f32 %v1097, %v1381
        %v1383 = vpop.f32.mrb[0].mxu0
        %v1384 = vpop.f32.mrb[0].mxu0
        %v1385 = vadd.f32 %v1097, %v1384
        %v1386 = vpop.f32.mrb[0].mxu0
        %1387 = vmatprep.mubr.bf16.mxu0 0
        %1388 = vmatmul.mubr.bf16.gmra.mrb[0].mxu0 %v1070
        %v1389 = vpop.f32.mrb[0].mxu0
        %v1390 = vadd.f32 %v1097, %v1389
        %v1391 = vpop.f32.mrb[0].mxu0
        %v1392 = vpop.f32.mrb[0].mxu0
        %v1393 = vadd.f32 %v1097, %v1392
        %v1394 = vpop.f32.mrb[0].mxu0
        %1395 = vmatprep.mubr.bf16.mxu0 0
        %1396 = vmatmul.mubr.bf16.gmra.mrb[0].mxu0 %v1071
        %v1397 = vpop.f32.mrb[0].mxu0
        %v1398 = vadd.f32 %v1097, %v1397
        %v1399 = vpop.f32.mrb[0].mxu0
        %v1400 = vpop.f32.mrb[0].mxu0
        %v1401 = vadd.f32 %v1097, %v1400
        %v1402 = vpop.f32.mrb[0].mxu0
        %1403 = vmatprep.mubr.bf16.mxu0 0
        %1404 = vmatmul.mubr.bf16.gmra.mrb[0].mxu0 %v1072
        %v1405 = vpop.f32.mrb[0].mxu0
        %v1406 = vadd.f32 %v1097, %v1405
        %v1407 = vpop.f32.mrb[0].mxu0
        %v1408 = vpop.f32.mrb[0].mxu0
        %v1409 = vadd.f32 %v1097, %v1408
        %v1410 = vpop.f32.mrb[0].mxu0
        %1411 = vmatprep.mubr.bf16.mxu0 0
        %1412 = vmatmul.mubr.bf16.gmra.mrb[0].mxu0 %v1073
        %v1413 = vpop.f32.mrb[0].mxu0
        %v1414 = vadd.f32 %v1097, %v1413
        %v1415 = vpop.f32.mrb[0].mxu0
        %v1416 = vpop.f32.mrb[0].mxu0
        %v1417 = vadd.f32 %v1097, %v1416
        %v1418 = vpop.f32.mrb[0].mxu0
        %1419 = vmatprep.mubr.bf16.mxu0 0
        %1420 = vmatmul.mubr.bf16.gmra.mrb[0].mxu0 %v1074
        %v1421 = vpop.f32.mrb[0].mxu0
        %v1422 = vadd.f32 %v1097, %v1421
        %v1423 = vpop.f32.mrb[0].mxu0
        %v1424 = vpop.f32.mrb[0].mxu0
        %v1425 = vadd.f32 %v1097, %v1424
        %v1426 = vpop.f32.mrb[0].mxu0
        %1427 = vmatprep.mubr.bf16.mxu0 0
        %1428 = vmatmul.mubr.bf16.gmra.mrb[0].mxu0 %v1075
        %v1429 = vpop.f32.mrb[0].mxu0
        %v1430 = vadd.f32 %v1097, %v1429
        %v1431 = vpop.f32.mrb[0].mxu0
        %v1432 = vpop.f32.mrb[0].mxu0
        %v1433 = vadd.f32 %v1097, %v1432
        %v1434 = vpop.f32.mrb[0].mxu0
        %1435 = vdwg.mxu0
        %vm1436 = vcmp.gt.f32.partialorder %v1182, 0.0
        %vm1437 = vcmp.gt.f32.partialorder %v1185, 0.0
        %vm1438 = vcmp.gt.f32.partialorder %v1190, 0.0
        %vm1439 = vcmp.gt.f32.partialorder %v1193, 0.0
        %vm1440 = vcmp.gt.f32.partialorder %v1198, 0.0
        %vm1441 = vcmp.gt.f32.partialorder %v1201, 0.0
        %vm1442 = vcmp.gt.f32.partialorder %v1206, 0.0
        %vm1443 = vcmp.gt.f32.partialorder %v1209, 0.0
        %vm1444 = vcmp.gt.f32.partialorder %v1214, 0.0
        %vm1445 = vcmp.gt.f32.partialorder %v1217, 0.0
        %vm1446 = vcmp.gt.f32.partialorder %v1222, 0.0
        %vm1447 = vcmp.gt.f32.partialorder %v1225, 0.0
        %vm1448 = vcmp.gt.f32.partialorder %v1230, 0.0
        %vm1449 = vcmp.gt.f32.partialorder %v1233, 0.0
        %vm1450 = vcmp.gt.f32.partialorder %v1238, 0.0
        %vm1451 = vcmp.gt.f32.partialorder %v1241, 0.0
        %vm1452 = vcmp.gt.f32.partialorder %v1246, 0.0
        %vm1453 = vcmp.gt.f32.partialorder %v1249, 0.0
        %vm1454 = vcmp.gt.f32.partialorder %v1254, 0.0
        %vm1455 = vcmp.gt.f32.partialorder %v1257, 0.0
        %vm1456 = vcmp.gt.f32.partialorder %v1262, 0.0
        %vm1457 = vcmp.gt.f32.partialorder %v1265, 0.0
        %vm1458 = vcmp.gt.f32.partialorder %v1270, 0.0
        %vm1459 = vcmp.gt.f32.partialorder %v1273, 0.0
        %vm1460 = vcmp.gt.f32.partialorder %v1278, 0.0
        %vm1461 = vcmp.gt.f32.partialorder %v1281, 0.0
        %vm1462 = vcmp.gt.f32.partialorder %v1286, 0.0
        %vm1463 = vcmp.gt.f32.partialorder %v1289, 0.0
        %vm1464 = vcmp.gt.f32.partialorder %v1294, 0.0
        %vm1465 = vcmp.gt.f32.partialorder %v1297, 0.0
        %vm1466 = vcmp.gt.f32.partialorder %v1302, 0.0
        %vm1467 = vcmp.gt.f32.partialorder %v1305, 0.0
        %vm1468 = vcmp.gt.f32.partialorder %v1310, 0.0
        %vm1469 = vcmp.gt.f32.partialorder %v1313, 0.0
        %vm1470 = vcmp.gt.f32.partialorder %v1318, 0.0
        %vm1471 = vcmp.gt.f32.partialorder %v1321, 0.0
        %vm1472 = vcmp.gt.f32.partialorder %v1326, 0.0
        %vm1473 = vcmp.gt.f32.partialorder %v1329, 0.0
        %vm1474 = vcmp.gt.f32.partialorder %v1334, 0.0
        %vm1475 = vcmp.gt.f32.partialorder %v1337, 0.0
        %vm1476 = vcmp.gt.f32.partialorder %v1342, 0.0
        %vm1477 = vcmp.gt.f32.partialorder %v1345, 0.0
        %vm1478 = vcmp.gt.f32.partialorder %v1350, 0.0
        %vm1479 = vcmp.gt.f32.partialorder %v1353, 0.0
        %vm1480 = vcmp.gt.f32.partialorder %v1358, 0.0
        %vm1481 = vcmp.gt.f32.partialorder %v1361, 0.0
        %vm1482 = vcmp.gt.f32.partialorder %v1366, 0.0
        %vm1483 = vcmp.gt.f32.partialorder %v1369, 0.0
        %vm1484 = vcmp.gt.f32.partialorder %v1374, 0.0
        %vm1485 = vcmp.gt.f32.partialorder %v1377, 0.0
        %vm1486 = vcmp.gt.f32.partialorder %v1382, 0.0
        %vm1487 = vcmp.gt.f32.partialorder %v1385, 0.0
        %vm1488 = vcmp.gt.f32.partialorder %v1390, 0.0
        %vm1489 = vcmp.gt.f32.partialorder %v1393, 0.0
        %vm1490 = vcmp.gt.f32.partialorder %v1398, 0.0
        %vm1491 = vcmp.gt.f32.partialorder %v1401, 0.0
        %vm1492 = vcmp.gt.f32.partialorder %v1406, 0.0
        %vm1493 = vcmp.gt.f32.partialorder %v1409, 0.0
        %vm1494 = vcmp.gt.f32.partialorder %v1414, 0.0
        %vm1495 = vcmp.gt.f32.partialorder %v1417, 0.0
        %vm1496 = vcmp.gt.f32.partialorder %v1422, 0.0
        %vm1497 = vcmp.gt.f32.partialorder %v1425, 0.0
        %vm1498 = vcmp.gt.f32.partialorder %v1430, 0.0
        %vm1499 = vcmp.gt.f32.partialorder %v1433, 0.0
        %v1500 = vmul.f32 %v1182, 0.01
        %v1501 = vmul.f32 %v1185, 0.01
        %v1502 = vmul.f32 %v1190, 0.01
        %v1503 = vmul.f32 %v1193, 0.01
        %v1504 = vmul.f32 %v1198, 0.01
        %v1505 = vmul.f32 %v1201, 0.01
        %v1506 = vmul.f32 %v1206, 0.01
        %v1507 = vmul.f32 %v1209, 0.01
        %v1508 = vmul.f32 %v1214, 0.01
        %v1509 = vmul.f32 %v1217, 0.01
        %v1510 = vmul.f32 %v1222, 0.01
        %v1511 = vmul.f32 %v1225, 0.01
        %v1512 = vmul.f32 %v1230, 0.01
        %v1513 = vmul.f32 %v1233, 0.01
        %v1514 = vmul.f32 %v1238, 0.01
        %v1515 = vmul.f32 %v1241, 0.01
        %v1516 = vmul.f32 %v1246, 0.01
        %v1517 = vmul.f32 %v1249, 0.01
        %v1518 = vmul.f32 %v1254, 0.01
        %v1519 = vmul.f32 %v1257, 0.01
        %v1520 = vmul.f32 %v1262, 0.01
        %v1521 = vmul.f32 %v1265, 0.01
        %v1522 = vmul.f32 %v1270, 0.01
        %v1523 = vmul.f32 %v1273, 0.01
        %v1524 = vmul.f32 %v1278, 0.01
        %v1525 = vmul.f32 %v1281, 0.01
        %v1526 = vmul.f32 %v1286, 0.01
        %v1527 = vmul.f32 %v1289, 0.01
        %v1528 = vmul.f32 %v1294, 0.01
        %v1529 = vmul.f32 %v1297, 0.01
        %v1530 = vmul.f32 %v1302, 0.01
        %v1531 = vmul.f32 %v1305, 0.01
        %v1532 = vmul.f32 %v1310, 0.01
        %v1533 = vmul.f32 %v1313, 0.01
        %v1534 = vmul.f32 %v1318, 0.01
        %v1535 = vmul.f32 %v1321, 0.01
        %v1536 = vmul.f32 %v1326, 0.01
        %v1537 = vmul.f32 %v1329, 0.01
        %v1538 = vmul.f32 %v1334, 0.01
        %v1539 = vmul.f32 %v1337, 0.01
        %v1540 = vmul.f32 %v1342, 0.01
        %v1541 = vmul.f32 %v1345, 0.01
        %v1542 = vmul.f32 %v1350, 0.01
        %v1543 = vmul.f32 %v1353, 0.01
        %v1544 = vmul.f32 %v1358, 0.01
        %v1545 = vmul.f32 %v1361, 0.01
        %v1546 = vmul.f32 %v1366, 0.01
        %v1547 = vmul.f32 %v1369, 0.01
        %v1548 = vmul.f32 %v1374, 0.01
        %v1549 = vmul.f32 %v1377, 0.01
        %v1550 = vmul.f32 %v1382, 0.01
        %v1551 = vmul.f32 %v1385, 0.01
        %v1552 = vmul.f32 %v1390, 0.01
        %v1553 = vmul.f32 %v1393, 0.01
        %v1554 = vmul.f32 %v1398, 0.01
        %v1555 = vmul.f32 %v1401, 0.01
        %v1556 = vmul.f32 %v1406, 0.01
        %v1557 = vmul.f32 %v1409, 0.01
        %v1558 = vmul.f32 %v1414, 0.01
        %v1559 = vmul.f32 %v1417, 0.01
        %v1560 = vmul.f32 %v1422, 0.01
        %v1561 = vmul.f32 %v1425, 0.01
        %v1562 = vmul.f32 %v1430, 0.01
        %v1563 = vmul.f32 %v1433, 0.01
        %v1564 = vsel %vm1436, %v1182, %v1500
        %v1565 = vsel %vm1437, %v1185, %v1501
        %v1566 = vsel %vm1438, %v1190, %v1502
        %v1567 = vsel %vm1439, %v1193, %v1503
        %v1568 = vsel %vm1440, %v1198, %v1504
        %v1569 = vsel %vm1441, %v1201, %v1505
        %v1570 = vsel %vm1442, %v1206, %v1506
        %v1571 = vsel %vm1443, %v1209, %v1507
        %v1572 = vsel %vm1444, %v1214, %v1508
        %v1573 = vsel %vm1445, %v1217, %v1509
        %v1574 = vsel %vm1446, %v1222, %v1510
        %v1575 = vsel %vm1447, %v1225, %v1511
        %v1576 = vsel %vm1448, %v1230, %v1512
        %v1577 = vsel %vm1449, %v1233, %v1513
        %v1578 = vsel %vm1450, %v1238, %v1514
        %v1579 = vsel %vm1451, %v1241, %v1515
        %v1580 = vsel %vm1452, %v1246, %v1516
        %v1581 = vsel %vm1453, %v1249, %v1517
        %v1582 = vsel %vm1454, %v1254, %v1518
        %v1583 = vsel %vm1455, %v1257, %v1519
        %v1584 = vsel %vm1456, %v1262, %v1520
        %v1585 = vsel %vm1457, %v1265, %v1521
        %v1586 = vsel %vm1458, %v1270, %v1522
        %v1587 = vsel %vm1459, %v1273, %v1523
        %v1588 = vsel %vm1460, %v1278, %v1524
        %v1589 = vsel %vm1461, %v1281, %v1525
        %v1590 = vsel %vm1462, %v1286, %v1526
        %v1591 = vsel %vm1463, %v1289, %v1527
        %v1592 = vsel %vm1464, %v1294, %v1528
        %v1593 = vsel %vm1465, %v1297, %v1529
        %v1594 = vsel %vm1466, %v1302, %v1530
        %v1595 = vsel %vm1467, %v1305, %v1531
        %v1596 = vsel %vm1468, %v1310, %v1532
        %v1597 = vsel %vm1469, %v1313, %v1533
        %v1598 = vsel %vm1470, %v1318, %v1534
        %v1599 = vsel %vm1471, %v1321, %v1535
        %v1600 = vsel %vm1472, %v1326, %v1536
        %v1601 = vsel %vm1473, %v1329, %v1537
        %v1602 = vsel %vm1474, %v1334, %v1538
        %v1603 = vsel %vm1475, %v1337, %v1539
        %v1604 = vsel %vm1476, %v1342, %v1540
        %v1605 = vsel %vm1477, %v1345, %v1541
        %v1606 = vsel %vm1478, %v1350, %v1542
        %v1607 = vsel %vm1479, %v1353, %v1543
        %v1608 = vsel %vm1480, %v1358, %v1544
        %v1609 = vsel %vm1481, %v1361, %v1545
        %v1610 = vsel %vm1482, %v1366, %v1546
        %v1611 = vsel %vm1483, %v1369, %v1547
        %v1612 = vsel %vm1484, %v1374, %v1548
        %v1613 = vsel %vm1485, %v1377, %v1549
        %v1614 = vsel %vm1486, %v1382, %v1550
        %v1615 = vsel %vm1487, %v1385, %v1551
        %v1616 = vsel %vm1488, %v1390, %v1552
        %v1617 = vsel %vm1489, %v1393, %v1553
        %v1618 = vsel %vm1490, %v1398, %v1554
        %v1619 = vsel %vm1491, %v1401, %v1555
        %v1620 = vsel %vm1492, %v1406, %v1556
        %v1621 = vsel %vm1493, %v1409, %v1557
        %v1622 = vsel %vm1494, %v1414, %v1558
        %v1623 = vsel %vm1495, %v1417, %v1559
        %v1624 = vsel %vm1496, %v1422, %v1560
        %v1625 = vsel %vm1497, %v1425, %v1561
        %v1626 = vsel %vm1498, %v1430, %v1562
        %v1627 = vsel %vm1499, %v1433, %v1563
        %1628 = vst [vmem:[%s218] sm:$0xff] %v1564
        %1629 = vst [vmem:[%s218 + $0x8] sm:$0xff] %v1565
        %1630 = vst [vmem:[%s218 + $0x10] sm:$0xff] %v1566
        %1631 = vst [vmem:[%s218 + $0x18] sm:$0xff] %v1567
        %1632 = vst [vmem:[%s218 + $0x20] sm:$0xff] %v1568
        %1633 = vst [vmem:[%s218 + $0x28] sm:$0xff] %v1569
        %1634 = vst [vmem:[%s218 + $0x30] sm:$0xff] %v1570
        %1635 = vst [vmem:[%s218 + $0x38] sm:$0xff] %v1571
        %1636 = vst [vmem:[%s218 + $0x40] sm:$0xff] %v1572
        %1637 = vst [vmem:[%s218 + $0x48] sm:$0xff] %v1573
        %1638 = vst [vmem:[%s218 + $0x50] sm:$0xff] %v1574
        %1639 = vst [vmem:[%s218 + $0x58] sm:$0xff] %v1575
        %1640 = vst [vmem:[%s218 + $0x60] sm:$0xff] %v1576
        %1641 = vst [vmem:[%s218 + $0x68] sm:$0xff] %v1577
        %1642 = vst [vmem:[%s218 + $0x70] sm:$0xff] %v1578
        %1643 = vst [vmem:[%s218 + $0x78] sm:$0xff] %v1579
        %1644 = vst [vmem:[%s218 + $0x80] sm:$0xff] %v1580
        %1645 = vst [vmem:[%s218 + $0x88] sm:$0xff] %v1581
        %1646 = vst [vmem:[%s218 + $0x90] sm:$0xff] %v1582
        %1647 = vst [vmem:[%s218 + $0x98] sm:$0xff] %v1583
        %1648 = vst [vmem:[%s218 + $0xa0] sm:$0xff] %v1584
        %1649 = vst [vmem:[%s218 + $0xa8] sm:$0xff] %v1585
        %1650 = vst [vmem:[%s218 + $0xb0] sm:$0xff] %v1586
        %1651 = vst [vmem:[%s218 + $0xb8] sm:$0xff] %v1587
        %1652 = vst [vmem:[%s218 + $0xc0] sm:$0xff] %v1588
        %1653 = vst [vmem:[%s218 + $0xc8] sm:$0xff] %v1589
        %1654 = vst [vmem:[%s218 + $0xd0] sm:$0xff] %v1590
        %1655 = vst [vmem:[%s218 + $0xd8] sm:$0xff] %v1591
        %1656 = vst [vmem:[%s218 + $0xe0] sm:$0xff] %v1592
        %1657 = vst [vmem:[%s218 + $0xe8] sm:$0xff] %v1593
        %1658 = vst [vmem:[%s218 + $0xf0] sm:$0xff] %v1594
        %1659 = vst [vmem:[%s218 + $0xf8] sm:$0xff] %v1595
        %1660 = vst [vmem:[%s218 + $0x100] sm:$0xff] %v1596
        %1661 = vst [vmem:[%s218 + $0x108] sm:$0xff] %v1597
        %1662 = vst [vmem:[%s218 + $0x110] sm:$0xff] %v1598
        %1663 = vst [vmem:[%s218 + $0x118] sm:$0xff] %v1599
        %1664 = vst [vmem:[%s218 + $0x120] sm:$0xff] %v1600
        %1665 = vst [vmem:[%s218 + $0x128] sm:$0xff] %v1601
        %1666 = vst [vmem:[%s218 + $0x130] sm:$0xff] %v1602
        %1667 = vst [vmem:[%s218 + $0x138] sm:$0xff] %v1603
        %1668 = vst [vmem:[%s218 + $0x140] sm:$0xff] %v1604
        %1669 = vst [vmem:[%s218 + $0x148] sm:$0xff] %v1605
        %1670 = vst [vmem:[%s218 + $0x150] sm:$0xff] %v1606
        %1671 = vst [vmem:[%s218 + $0x158] sm:$0xff] %v1607
        %1672 = vst [vmem:[%s218 + $0x160] sm:$0xff] %v1608
        %1673 = vst [vmem:[%s218 + $0x168] sm:$0xff] %v1609
        %1674 = vst [vmem:[%s218 + $0x170] sm:$0xff] %v1610
        %1675 = vst [vmem:[%s218 + $0x178] sm:$0xff] %v1611
        %1676 = vst [vmem:[%s218 + $0x180] sm:$0xff] %v1612
        %1677 = vst [vmem:[%s218 + $0x188] sm:$0xff] %v1613
        %1678 = vst [vmem:[%s218 + $0x190] sm:$0xff] %v1614
        %1679 = vst [vmem:[%s218 + $0x198] sm:$0xff] %v1615
        %1680 = vst [vmem:[%s218 + $0x1a0] sm:$0xff] %v1616
        %1681 = vst [vmem:[%s218 + $0x1a8] sm:$0xff] %v1617
        %1682 = vst [vmem:[%s218 + $0x1b0] sm:$0xff] %v1618
        %1683 = vst [vmem:[%s218 + $0x1b8] sm:$0xff] %v1619
        %1684 = vst [vmem:[%s218 + $0x1c0] sm:$0xff] %v1620
        %1685 = vst [vmem:[%s218 + $0x1c8] sm:$0xff] %v1621
        %1686 = vst [vmem:[%s218 + $0x1d0] sm:$0xff] %v1622
        %1687 = vst [vmem:[%s218 + $0x1d8] sm:$0xff] %v1623
        %1688 = vst [vmem:[%s218 + $0x1e0] sm:$0xff] %v1624
        %1689 = vst [vmem:[%s218 + $0x1e8] sm:$0xff] %v1625
        %1690 = vst [vmem:[%s218 + $0x1f0] sm:$0xff] %v1626
        %1691 = vst [vmem:[%s218 + $0x1f8] sm:$0xff] %v1627
        %s1692 = sand.u32 %s137, 1
        %s1693 = scalar_lea.sflag [#allocation3], %s1692
        %s1694 = sand.u32 %s137, 1
        %s1695 = smul.addr %s1694, 512
        %s1696 = scalar_lea.vmem [#allocation2], %s1695
        // Predicated region
        $region41: #{tpu_custom_call.1} parent=39 // pred_check
          %p1697 = pneg %p147
        $region42: #{tpu_custom_call.1} parent=39 // pred_check_branch
          %1699 = sbr.rel (%p1697) target = $region44
        $region43: #{tpu_custom_call.1} parent=39 // pred_region
          %s1700 = smul.u32 64, %s19
          %s1702 = ssub.s32 8192, 8192
          %1703 = vsyncadd %s1693, %s1702
          %s1704 = smul.addr %s1700, 128
          %s1705 = scalar_lea.hbm %s5, %s1704
          %s1706 = sshll.u32 %s1696, 4
          %s1707 = int_to_ptr.vmem [resolvable:$true] %s1706
          %1712 = dma.vmem_to_hbm [thread:$0]  %s1707, 8192, %s1705, %s1693, 128, 128, 8
        $region44: #{tpu_custom_call.1} parent=39 // pred_fallthru
          _
      $region40: #{tpu_custom_call.1} parent=5 // pred_fallthru
        _
      %p1713 = scmp.le.s32.totalorder 2, %s14
      // Predicated region
      $region45: #{tpu_custom_call.1} parent=5 // pred_check
        %p1714 = pneg %p1713
      $region46: #{tpu_custom_call.1} parent=5 // pred_check_branch
        %1716 = sbr.rel (%p1714) target = $region48
      $region47: #{tpu_custom_call.1} parent=5 // pred_region
        %s1717 = ssub.s32 %s14, 2
        // Predicated region
        $region49: #{tpu_custom_call.1} parent=47 // pred_check
          %p1718 = pneg %p153
        $region50: #{tpu_custom_call.1} parent=47 // pred_check_branch
          %1720 = sbr.rel (%p1718) target = $region52
        $region51: #{tpu_custom_call.1} parent=47 // pred_region
          %s1721 = sand.u32 %s138, 1
          %s1722 = scalar_lea.sflag [#allocation3], %s1721
          %s1723 = sand.u32 %s138, 1
          %s1724 = smul.addr %s1723, 512
          %s1725 = scalar_lea.vmem [#allocation2], %s1724
          %1726 = dma.done %s1722, 8192
        $region52: #{tpu_custom_call.1} parent=47 // pred_fallthru
          _
      $region48: #{tpu_custom_call.1} parent=5 // pred_fallthru
        _
    $region6: #{tpu_custom_call.1} parent=1 // loop_footer
      %s18 = sadd.s32 1, %s14
    $region7: #{tpu_custom_call.1} parent=1 // loop_footer_branch
      %13 = sbr.rel target = $region3
    $region8: #{tpu_custom_call.1} parent=1 // loop_exit
      _
    %1727 = vsyncpa [#allocation3], 1
    %s1728 = scalar_lea.sflag [#allocation3], 1
    %1729 = vsyncpa %s1728, 1

</llo_original>
